<compile_context>
chip_gen: v7x
topology: tpu7x:2x2x1
jax: 0.10.0
libtpu: 0.0.40
codegen_flags: <defaults>
</compile_context>

<pallas_src>
import jax
import jax.numpy as jnp
import numpy as np
from jax.experimental import pallas as pl
from jax.experimental.pallas import tpu as pltpu

EPS = 1e-5  # GroupNorm default eps in PyTorch


def pose_head_kernel(x_ref, wup_ref, bup_ref, w1_ref, b1_ref, w2_ref, b2_ref,
                     sdown_ref, sup_ref, o_ref):
    """One batch sample per grid step; channels-major (channels, HW) tiles, HW on lanes.

    x_ref    : (Cin, HW)  bf16   backbone feature (batch dim squeezed by the BlockSpec)
    wup_ref  : (Cup, Cin) bf16   up_sample 1x1 conv            bup_ref: (Cup, 1) f32
    w1_ref   : (JD, Cup)  bf16   fused GN1-affine/final_layer/pose-conv1  b1_ref: (JD, 1) f32
    w2_ref   : (J, JD)    bf16   fused GN(J)-affine/pose-conv2/depth-sum  b2_ref: (J, 1) f32
    sdown_ref: (J, JD)    bf16   per-joint averaging selector (rows = 1/(D*HW) on a joint's D rows)
    sup_ref  : (JD, J)    bf16   per-joint 0/1 broadcast selector
    o_ref    : (J, HW)    f32
    """
    J, HW = o_ref.shape
    Cup = wup_ref.shape[0]
    f32 = jnp.float32
    bf16 = jnp.bfloat16
    inv_n1 = 1.0 / (Cup * HW)

    # up_sample: 1x1 conv == channel matmul (bf16 MXU, f32 acc), then tanh-GELU (EUP)
    u = jnp.dot(wup_ref[...], x_ref[...], preferred_element_type=f32) + bup_ref[...]
    u = jax.nn.gelu(u, approximate=True)

    # norm1 = GroupNorm(1, 256): per-sample stats over all (C, HW); single pass, f32
    mu = jnp.sum(u) * inv_n1
    var = jnp.sum(u * u) * inv_n1 - mu * mu
    un = ((u - mu) * jax.lax.rsqrt(var + EPS)).astype(bf16)

    # fused (norm1 affine -> final_layer -> pose Conv3d #1), then tanh-GELU
    p = jnp.dot(w1_ref[...], un, preferred_element_type=f32) + b1_ref[...]
    p = jax.nn.gelu(p, approximate=True)

    # pose GroupNorm(J, J): per-joint stats over (D, HW).  Small selector matmuls + lane
    # reductions replace the old (JD,JD)x(JD,HW) block-average matmuls.
    mean_j = jnp.sum(jnp.dot(sdown_ref[...], p.astype(bf16),
                             preferred_element_type=f32),
                     axis=1, keepdims=True)                       # (J, 1) per-joint mean
    ex2_j = jnp.sum(jnp.dot(sdown_ref[...], (p * p).astype(bf16),
                            preferred_element_type=f32),
                    axis=1, keepdims=True)                        # (J, 1) per-joint E[p^2]
    inv_j = jax.lax.rsqrt(ex2_j - mean_j * mean_j + EPS)          # (J, 1) 1/sigma
    scale = jnp.dot(sup_ref[...],
                    jnp.broadcast_to(inv_j, (J, HW)).astype(bf16),
                    preferred_element_type=f32)                   # (JD, HW) 1/sigma per joint
    shift = jnp.dot(sup_ref[...],
                    jnp.broadcast_to(-mean_j * inv_j, (J, HW)).astype(bf16),
                    preferred_element_type=f32)                   # (JD, HW) -mu/sigma per joint
    pn = (p * scale + shift).astype(bf16)

    # fused (GroupNorm(J) affine -> pose Conv3d #2 -> depth sum); lane-dense f32 store
    o_ref[...] = jnp.dot(w2_ref[...], pn, preferred_element_type=f32) + b2_ref[...]


def prepare_fused_weights(params, num_joints, depth_dim, HW):
    """Host-side weight fusion; run ONCE at model init (hoisted out of the per-call path)."""
    J, D = num_joints, depth_dim
    f32, bf16 = jnp.float32, jnp.bfloat16

    eye_d = jnp.eye(D, dtype=f32)
    m1 = jnp.kron(params['w_p1'].T, eye_d)                        # (JD, JD) pose Conv3d #1
    m2 = jnp.kron(params['w_p2'].T, eye_d)                        # (JD, JD) pose Conv3d #2
    s = jnp.kron(jnp.eye(J, dtype=f32), jnp.ones((D, 1), f32))    # (JD, J) joint selector

    bp1 = jnp.repeat(params['b_p1'], D)                           # (JD,)
    bp2 = jnp.repeat(params['b_p2'], D)                           # (JD,)
    gcol = jnp.repeat(params['gamma_p'], D)                       # (JD,)
    bcol = jnp.repeat(params['beta_p'], D)                        # (JD,)

    # Fold (norm1 affine -> final_layer -> pose Conv3d #1) into one matrix + bias.
    w1 = (params['gamma1'][:, None] * params['w_final']) @ m1                   # (Cup, JD)
    b1 = (params['beta1'] @ params['w_final'] + params['b_final']) @ m1 + bp1   # (JD,)
    # Fold (GroupNorm(J) affine -> pose Conv3d #2 -> depth sum) into one matrix + bias.
    w2 = (gcol[:, None] * m2) @ s                                                # (JD, J)
    b2 = (bcol @ m2 + bp2) @ s                                                   # (J,)

    # TODO(synk): sdown bakes 1/(D*HW) at init, tying the kernel to a fixed heatmap
    #             resolution; recompute if H/W change.
    return dict(
        wup=params['w_up'].T.astype(bf16),            # (Cup, Cin)
        bup=params['b_up'][:, None].astype(f32),      # (Cup, 1)
        w1=w1.T.astype(bf16),                         # (JD, Cup)
        b1=b1[:, None].astype(f32),                   # (JD, 1)
        w2=w2.T.astype(bf16),                         # (J, JD)
        b2=b2[:, None].astype(f32),                   # (J, 1)
        sdown=(s.T / float(D * HW)).astype(bf16),     # (J, JD)
        sup=s.astype(bf16),                           # (JD, J)
    )


def pool_attn_hr_pose_head(x_feature_nchw, fused, num_joints, depth_dim):
    """Runs the PoolAttnHR_Pose head (everything after the backbone) as one Pallas call."""
    B, Cin, H, W = x_feature_nchw.shape
    HW = H * W
    J, D = num_joints, depth_dim
    JD = J * D
    Cup = fused['wup'].shape[0]

    # channels-major pixel flattening (pure reshape) + bf16 at the DMA boundary
    x = x_feature_nchw.reshape(B, Cin, HW).astype(jnp.bfloat16)

    const = lambda b: (0, 0)   # weights: same block every grid step -> staged once
    out = pl.pallas_call(
        pose_head_kernel,
        out_shape=jax.ShapeDtypeStruct((B, J, HW), jnp.float32),
        grid_spec=pltpu.PrefetchScalarGridSpec(
            num_scalar_prefetch=0,
            grid=(B,),                                             # one sample per grid step
            in_specs=[
                pl.BlockSpec((None, Cin, HW), lambda b: (b, 0, 0)),  # x (batch dim squeezed)
                pl.BlockSpec((Cup, Cin), const),                     # wup
                pl.BlockSpec((Cup, 1), const),                       # bup
                pl.BlockSpec((JD, Cup), const),                      # w1
                pl.BlockSpec((JD, 1), const),                        # b1
                pl.BlockSpec((J, JD), const),                        # w2
                pl.BlockSpec((J, 1), const),                         # b2
                pl.BlockSpec((J, JD), const),                        # sdown
                pl.BlockSpec((JD, J), const),                        # sup
            ],
            out_specs=pl.BlockSpec((None, J, HW), lambda b: (b, 0, 0)),
        ),
        # TODO(synk): for realistic heatmap resolutions add an HW-tile grid axis
        #             (>=512-lane, 128-multiple tiles) with accumulator-based GroupNorm
        #             stats so the per-step VMEM stays bounded on v7x's 64 MiB.
        compiler_params=pltpu.CompilerParams(
            dimension_semantics=("parallel",),                     # megacore on v7x
        ),
    )(x, fused['wup'], fused['bup'], fused['w1'], fused['b1'],
      fused['w2'], fused['b2'], fused['sdown'], fused['sup'])

    # back to PyTorch output convention (B, J, H, W) — pure reshape, no transpose
    return out.reshape(B, J, H, W)


def reference_head(x_nchw, params, J, D):
    """Pure-JAX f32 reference of the same head (PyTorch semantics; exact-erf GELU)."""
    B, Cin, H, W = x_nchw.shape
    gelu = lambda t: jax.nn.gelu(t, approximate=False)
    x = jnp.transpose(x_nchw, (0, 2, 3, 1))                         # (B,H,W,Cin)
    u = gelu(jnp.einsum('bhwc,cd->bhwd', x, params['w_up']) + params['b_up'])
    mean = jnp.mean(u, axis=(1, 2, 3), keepdims=True)
    var = jnp.mean((u - mean) ** 2, axis=(1, 2, 3), keepdims=True)
    u = (u - mean) / jnp.sqrt(var + EPS) * params['gamma1'] + params['beta1']
    f = jnp.einsum('bhwc,cd->bhwd', u, params['w_final']) + params['b_final']
    f = f.reshape(B, H, W, J, D)
    p = jnp.einsum('bhwjd,kj->bhwkd', f, params['w_p1']) + params['b_p1'][None, None, None, :, None]
    p = gelu(p)
    mean = jnp.mean(p, axis=(1, 2, 4), keepdims=True)
    var = jnp.mean((p - mean) ** 2, axis=(1, 2, 4), keepdims=True)
    p = (p - mean) / jnp.sqrt(var + EPS) * params['gamma_p'][None, None, None, :, None] \
        + params['beta_p'][None, None, None, :, None]
    q = jnp.einsum('bhwjd,kj->bhwkd', p, params['w_p2']) + params['b_p2'][None, None, None, :, None]
    out = jnp.sum(q, axis=4)                                        # (B,H,W,J) depth-sum
    return jnp.transpose(out, (0, 3, 1, 2))


def make_params(key, c_in, c_up, num_joints, depth_dim):
    J, D = num_joints, depth_dim
    ks = jax.random.split(key, 8)
    return {
        # up_sample: Conv2d(embed_dims[0], 256, 1); module init: std=0.001, bias=0
        'w_up': 0.001 * jax.random.normal(ks[0], (c_in, c_up), jnp.float32),
        'b_up': jnp.zeros((c_up,), jnp.float32),
        # norm1 = GroupNorm(1, 256) affine
        'gamma1': 1.0 + 0.01 * jax.random.normal(ks[1], (c_up,), jnp.float32),
        'beta1': 0.01 * jax.random.normal(ks[2], (c_up,), jnp.float32),
        # final_layer: Conv2d(256, J*D, 1)
        'w_final': 0.05 * jax.random.normal(ks[3], (c_up, J * D), jnp.float32),
        'b_final': 0.01 * jax.random.normal(ks[4], (J * D,), jnp.float32),
        # pose_layer: Conv3d(J, J, 1) -> GELU -> GroupNorm(J, J) -> Conv3d(J, J, 1)
        'w_p1': 0.2 * jax.random.normal(ks[5], (J, J), jnp.float32),   # [out_j, in_j]
        'b_p1': jnp.zeros((J,), jnp.float32),
        'gamma_p': jnp.ones((J,), jnp.float32),
        'beta_p': jnp.zeros((J,), jnp.float32),
        'w_p2': 0.2 * jax.random.normal(ks[6], (J, J), jnp.float32),
        'b_p2': 0.01 * jax.random.normal(ks[7], (J,), jnp.float32),
    }


if __name__ == "__main__":
    # Small shapes consistent with the module's forward:
    #   num_joints=8, depth_dim=8, embed_dims[0]=32, heatmap 16x16, batch 2
    B, C_IN, Hm, Wm = 2, 32, 16, 16
    NUM_JOINTS, DEPTH_DIM, C_UP = 8, 8, 256

    key = jax.random.PRNGKey(0)
    k_x, k_p = jax.random.split(key)
    # PoolAttnFormer_hr backbone is stubbed: this IS the heatmap-resolution feature map.
    x_feature = jax.random.normal(k_x, (B, C_IN, Hm, Wm), jnp.float32)
    params = make_params(k_p, C_IN, C_UP, NUM_JOINTS, DEPTH_DIM)

    # Weight fusion happens exactly once (model init); the per-call path is just the
    # Pallas kernel plus two pure reshapes and a bf16 cast.
    fused = prepare_fused_weights(params, NUM_JOINTS, DEPTH_DIM, Hm * Wm)
    head = jax.jit(lambda xf: pool_attn_hr_pose_head(xf, fused, NUM_JOINTS, DEPTH_DIM))

    out = jax.block_until_ready(head(x_feature))
    ref = jax.block_until_ready(reference_head(x_feature, params, NUM_JOINTS, DEPTH_DIM))

    assert out.shape == (B, NUM_JOINTS, Hm, Wm), out.shape
    # bf16 MXU operands + tanh GELU + single-pass GroupNorm stats => loosened tolerances
    # vs. the exact-f32 PyTorch semantics.
    np.testing.assert_allclose(np.asarray(out), np.asarray(ref), rtol=5e-2, atol=6e-2)
    print("KERNEL_OK")
</pallas_src>

<mosaic_0001>
module attributes {stable_mosaic.version = 11 : i64} {
  func.func @pose_head_kernel(%arg0: i32, %arg1: memref<1x32x256xbf16, #tpu.memory_space<vmem>>, %arg2: memref<256x32xbf16, #tpu.memory_space<vmem>>, %arg3: memref<256x1xf32, #tpu.memory_space<vmem>>, %arg4: memref<64x256xbf16, #tpu.memory_space<vmem>>, %arg5: memref<64x1xf32, #tpu.memory_space<vmem>>, %arg6: memref<8x64xbf16, #tpu.memory_space<vmem>>, %arg7: memref<8x1xf32, #tpu.memory_space<vmem>>, %arg8: memref<8x64xbf16, #tpu.memory_space<vmem>>, %arg9: memref<64x8xbf16, #tpu.memory_space<vmem>>, %arg10: memref<1x8x256xf32, #tpu.memory_space<vmem>>) attributes {dimension_semantics = [#tpu.dimension_semantics<parallel>], iteration_bounds = array<i64: 2>, scalar_prefetch = 0 : i64, scratch_operands = 0 : i64, tpu.core_type = #tpu.core_type<tc>, window_params = [{transform_indices = @transform_0, window_bounds = array<i64: 1, 32, 256>}, {pipeline_mode = #tpu.pipeline_mode<synchronous>, transform_indices = @transform_1, window_bounds = array<i64: 256, 32>}, {pipeline_mode = #tpu.pipeline_mode<synchronous>, transform_indices = @transform_2, window_bounds = array<i64: 256, 1>}, {pipeline_mode = #tpu.pipeline_mode<synchronous>, transform_indices = @transform_3, window_bounds = array<i64: 64, 256>}, {pipeline_mode = #tpu.pipeline_mode<synchronous>, transform_indices = @transform_4, window_bounds = array<i64: 64, 1>}, {pipeline_mode = #tpu.pipeline_mode<synchronous>, transform_indices = @transform_5, window_bounds = array<i64: 8, 64>}, {pipeline_mode = #tpu.pipeline_mode<synchronous>, transform_indices = @transform_6, window_bounds = array<i64: 8, 1>}, {pipeline_mode = #tpu.pipeline_mode<synchronous>, transform_indices = @transform_7, window_bounds = array<i64: 8, 64>}, {pipeline_mode = #tpu.pipeline_mode<synchronous>, transform_indices = @transform_8, window_bounds = array<i64: 64, 8>}, {transform_indices = @transform_9, window_bounds = array<i64: 1, 8, 256>}]} {
    %c0 = arith.constant 0 : index
    %c0_0 = arith.constant 0 : index
    %0 = vector.load %arg2[%c0, %c0_0] : memref<256x32xbf16, #tpu.memory_space<vmem>>, vector<256x32xbf16>
    %c0_1 = arith.constant 0 : index
    %c0_2 = arith.constant 0 : index
    %c0_3 = arith.constant 0 : index
    %1 = vector.load %arg1[%c0_1, %c0_2, %c0_3] : memref<1x32x256xbf16, #tpu.memory_space<vmem>>, vector<1x32x256xbf16>
    %2 = vector.shape_cast %1 : vector<1x32x256xbf16> to vector<32x256xbf16>
    %cst = arith.constant dense<0.000000e+00> : vector<256x256xf32>
    %3 = tpu.matmul %0, %2, %cst {dimension_numbers = #tpu.dot_dimension_numbers<[1], [0], [0], [1], [0, 0, 1, 1], [], []>} : vector<256x32xbf16>, vector<32x256xbf16>, vector<256x256xf32> -> vector<256x256xf32>
    %c0_4 = arith.constant 0 : index
    %c0_5 = arith.constant 0 : index
    %4 = vector.load %arg3[%c0_4, %c0_5] : memref<256x1xf32, #tpu.memory_space<vmem>>, vector<256x1xf32>
    %5 = vector.broadcast %4 : vector<256x1xf32> to vector<256x256xf32>
    %6 = arith.addf %3, %5 : vector<256x256xf32>
    %7 = arith.mulf %6, %6 : vector<256x256xf32>
    %8 = arith.mulf %6, %7 : vector<256x256xf32>
    %cst_6 = arith.constant 4.471500e-02 : f32
    %9 = vector.broadcast %cst_6 : f32 to vector<256x256xf32>
    %10 = arith.mulf %9, %8 : vector<256x256xf32>
    %11 = arith.addf %6, %10 : vector<256x256xf32>
    %cst_7 = arith.constant 0.797884583 : f32
    %12 = vector.broadcast %cst_7 : f32 to vector<256x256xf32>
    %13 = arith.mulf %12, %11 : vector<256x256xf32>
    %14 = math.tanh %13 : vector<256x256xf32>
    %cst_8 = arith.constant 1.000000e+00 : f32
    %15 = vector.broadcast %cst_8 : f32 to vector<256x256xf32>
    %16 = arith.addf %15, %14 : vector<256x256xf32>
    %cst_9 = arith.constant 5.000000e-01 : f32
    %17 = vector.broadcast %cst_9 : f32 to vector<256x256xf32>
    %18 = arith.mulf %17, %16 : vector<256x256xf32>
    %19 = arith.mulf %6, %18 : vector<256x256xf32>
    %20 = vector.shape_cast %19 : vector<256x256xf32> to vector<1x256x256xf32>
    %cst_10 = arith.constant dense<0.000000e+00> : vector<1xf32>
    %21 = vector.multi_reduction <add>, %20, %cst_10 [1, 2] : vector<1x256x256xf32> to vector<1xf32>
    %22 = vector.shape_cast %21 : vector<1xf32> to vector<1x1x1xf32>
    %23 = vector.extract %22[0, 0, 0] : f32 from vector<1x1x1xf32>
    %cst_11 = arith.constant 1.52587891E-5 : f32
    %24 = arith.mulf %23, %cst_11 : f32
    %25 = arith.mulf %19, %19 : vector<256x256xf32>
    %26 = vector.shape_cast %25 : vector<256x256xf32> to vector<1x256x256xf32>
    %cst_12 = arith.constant dense<0.000000e+00> : vector<1xf32>
    %27 = vector.multi_reduction <add>, %26, %cst_12 [1, 2] : vector<1x256x256xf32> to vector<1xf32>
    %28 = vector.shape_cast %27 : vector<1xf32> to vector<1x1x1xf32>
    %29 = vector.extract %28[0, 0, 0] : f32 from vector<1x1x1xf32>
    %cst_13 = arith.constant 1.52587891E-5 : f32
    %30 = arith.mulf %29, %cst_13 : f32
    %31 = arith.mulf %24, %24 : f32
    %32 = arith.subf %30, %31 : f32
    %33 = vector.broadcast %24 : f32 to vector<256x256xf32>
    %34 = arith.subf %19, %33 : vector<256x256xf32>
    %cst_14 = arith.constant 9.99999974E-6 : f32
    %35 = arith.addf %32, %cst_14 : f32
    %36 = math.rsqrt %35 : f32
    %37 = vector.broadcast %36 : f32 to vector<256x256xf32>
    %38 = arith.mulf %34, %37 : vector<256x256xf32>
    %39 = arith.truncf %38 : vector<256x256xf32> to vector<256x256xbf16>
    %c0_15 = arith.constant 0 : index
    %c0_16 = arith.constant 0 : index
    %40 = vector.load %arg4[%c0_15, %c0_16] : memref<64x256xbf16, #tpu.memory_space<vmem>>, vector<64x256xbf16>
    %cst_17 = arith.constant dense<0.000000e+00> : vector<64x256xf32>
    %41 = tpu.matmul %40, %39, %cst_17 {dimension_numbers = #tpu.dot_dimension_numbers<[1], [0], [0], [1], [0, 0, 1, 1], [], []>} : vector<64x256xbf16>, vector<256x256xbf16>, vector<64x256xf32> -> vector<64x256xf32>
    %c0_18 = arith.constant 0 : index
    %c0_19 = arith.constant 0 : index
    %42 = vector.load %arg5[%c0_18, %c0_19] : memref<64x1xf32, #tpu.memory_space<vmem>>, vector<64x1xf32>
    %43 = vector.broadcast %42 : vector<64x1xf32> to vector<64x256xf32>
    %44 = arith.addf %41, %43 : vector<64x256xf32>
    %45 = arith.mulf %44, %44 : vector<64x256xf32>
    %46 = arith.mulf %44, %45 : vector<64x256xf32>
    %cst_20 = arith.constant 4.471500e-02 : f32
    %47 = vector.broadcast %cst_20 : f32 to vector<64x256xf32>
    %48 = arith.mulf %47, %46 : vector<64x256xf32>
    %49 = arith.addf %44, %48 : vector<64x256xf32>
    %cst_21 = arith.constant 0.797884583 : f32
    %50 = vector.broadcast %cst_21 : f32 to vector<64x256xf32>
    %51 = arith.mulf %50, %49 : vector<64x256xf32>
    %52 = math.tanh %51 : vector<64x256xf32>
    %cst_22 = arith.constant 1.000000e+00 : f32
    %53 = vector.broadcast %cst_22 : f32 to vector<64x256xf32>
    %54 = arith.addf %53, %52 : vector<64x256xf32>
    %cst_23 = arith.constant 5.000000e-01 : f32
    %55 = vector.broadcast %cst_23 : f32 to vector<64x256xf32>
    %56 = arith.mulf %55, %54 : vector<64x256xf32>
    %57 = arith.mulf %44, %56 : vector<64x256xf32>
    %c0_24 = arith.constant 0 : index
    %c0_25 = arith.constant 0 : index
    %58 = vector.load %arg8[%c0_24, %c0_25] : memref<8x64xbf16, #tpu.memory_space<vmem>>, vector<8x64xbf16>
    %59 = arith.truncf %57 : vector<64x256xf32> to vector<64x256xbf16>
    %cst_26 = arith.constant dense<0.000000e+00> : vector<8x256xf32>
    %60 = tpu.matmul %58, %59, %cst_26 {dimension_numbers = #tpu.dot_dimension_numbers<[1], [0], [0], [1], [0, 0, 1, 1], [], []>} : vector<8x64xbf16>, vector<64x256xbf16>, vector<8x256xf32> -> vector<8x256xf32>
    %cst_27 = arith.constant dense<0.000000e+00> : vector<8xf32>
    %61 = vector.multi_reduction <add>, %60, %cst_27 [1] : vector<8x256xf32> to vector<8xf32>
    %62 = vector.shape_cast %61 : vector<8xf32> to vector<8x1xf32>
    %c0_28 = arith.constant 0 : index
    %c0_29 = arith.constant 0 : index
    %63 = vector.load %arg8[%c0_28, %c0_29] : memref<8x64xbf16, #tpu.memory_space<vmem>>, vector<8x64xbf16>
    %64 = arith.mulf %57, %57 : vector<64x256xf32>
    %65 = arith.truncf %64 : vector<64x256xf32> to vector<64x256xbf16>
    %cst_30 = arith.constant dense<0.000000e+00> : vector<8x256xf32>
    %66 = tpu.matmul %63, %65, %cst_30 {dimension_numbers = #tpu.dot_dimension_numbers<[1], [0], [0], [1], [0, 0, 1, 1], [], []>} : vector<8x64xbf16>, vector<64x256xbf16>, vector<8x256xf32> -> vector<8x256xf32>
    %cst_31 = arith.constant dense<0.000000e+00> : vector<8xf32>
    %67 = vector.multi_reduction <add>, %66, %cst_31 [1] : vector<8x256xf32> to vector<8xf32>
    %68 = vector.shape_cast %67 : vector<8xf32> to vector<8x1xf32>
    %69 = arith.mulf %62, %62 : vector<8x1xf32>
    %70 = arith.subf %68, %69 : vector<8x1xf32>
    %cst_32 = arith.constant 9.99999974E-6 : f32
    %71 = vector.broadcast %cst_32 : f32 to vector<8x1xf32>
    %72 = arith.addf %70, %71 : vector<8x1xf32>
    %73 = math.rsqrt %72 : vector<8x1xf32>
    %c0_33 = arith.constant 0 : index
    %c0_34 = arith.constant 0 : index
    %74 = vector.load %arg9[%c0_33, %c0_34] : memref<64x8xbf16, #tpu.memory_space<vmem>>, vector<64x8xbf16>
    %75 = vector.shape_cast %73 : vector<8x1xf32> to vector<8x1xf32>
    %76 = vector.broadcast %75 : vector<8x1xf32> to vector<8x256xf32>
    %77 = arith.truncf %76 : vector<8x256xf32> to vector<8x256xbf16>
    %cst_35 = arith.constant dense<0.000000e+00> : vector<64x256xf32>
    %78 = tpu.matmul %74, %77, %cst_35 {dimension_numbers = #tpu.dot_dimension_numbers<[1], [0], [0], [1], [0, 0, 1, 1], [], []>} : vector<64x8xbf16>, vector<8x256xbf16>, vector<64x256xf32> -> vector<64x256xf32>
    %c0_36 = arith.constant 0 : index
    %c0_37 = arith.constant 0 : index
    %79 = vector.load %arg9[%c0_36, %c0_37] : memref<64x8xbf16, #tpu.memory_space<vmem>>, vector<64x8xbf16>
    %cst_38 = arith.constant 0.000000e+00 : f32
    %80 = vector.broadcast %cst_38 : f32 to vector<8x1xf32>
    %81 = arith.subf %80, %62 : vector<8x1xf32>
    %82 = arith.mulf %81, %73 : vector<8x1xf32>
    %83 = vector.shape_cast %82 : vector<8x1xf32> to vector<8x1xf32>
    %84 = vector.broadcast %83 : vector<8x1xf32> to vector<8x256xf32>
    %85 = arith.truncf %84 : vector<8x256xf32> to vector<8x256xbf16>
    %cst_39 = arith.constant dense<0.000000e+00> : vector<64x256xf32>
    %86 = tpu.matmul %79, %85, %cst_39 {dimension_numbers = #tpu.dot_dimension_numbers<[1], [0], [0], [1], [0, 0, 1, 1], [], []>} : vector<64x8xbf16>, vector<8x256xbf16>, vector<64x256xf32> -> vector<64x256xf32>
    %87 = arith.mulf %57, %78 : vector<64x256xf32>
    %88 = arith.addf %87, %86 : vector<64x256xf32>
    %89 = arith.truncf %88 : vector<64x256xf32> to vector<64x256xbf16>
    %c0_40 = arith.constant 0 : index
    %c0_41 = arith.constant 0 : index
    %90 = vector.load %arg6[%c0_40, %c0_41] : memref<8x64xbf16, #tpu.memory_space<vmem>>, vector<8x64xbf16>
    %cst_42 = arith.constant dense<0.000000e+00> : vector<8x256xf32>
    %91 = tpu.matmul %90, %89, %cst_42 {dimension_numbers = #tpu.dot_dimension_numbers<[1], [0], [0], [1], [0, 0, 1, 1], [], []>} : vector<8x64xbf16>, vector<64x256xbf16>, vector<8x256xf32> -> vector<8x256xf32>
    %c0_43 = arith.constant 0 : index
    %c0_44 = arith.constant 0 : index
    %92 = vector.load %arg7[%c0_43, %c0_44] : memref<8x1xf32, #tpu.memory_space<vmem>>, vector<8x1xf32>
    %93 = vector.broadcast %92 : vector<8x1xf32> to vector<8x256xf32>
    %94 = arith.addf %91, %93 : vector<8x256xf32>
    %c0_45 = arith.constant 0 : index
    %c0_46 = arith.constant 0 : index
    %c0_47 = arith.constant 0 : index
    %95 = vector.load %arg10[%c0_45, %c0_46, %c0_47] : memref<1x8x256xf32, #tpu.memory_space<vmem>>, vector<1x8x256xf32>
    %96 = vector.shape_cast %95 : vector<1x8x256xf32> to vector<8x256xf32>
    %97 = vector.shape_cast %94 : vector<8x256xf32> to vector<1x8x256xf32>
    tpu.vector_store %arg10[%c0_45, %c0_46, %c0_47], %97 {strides = array<i32>} : memref<1x8x256xf32, #tpu.memory_space<vmem>>, vector<1x8x256xf32>,
    return
  }
  func.func @transform_0(%arg0: i32) -> (i32, i32, i32) {
    %c0_i32 = arith.constant 0 : i32
    %c0_i32_0 = arith.constant 0 : i32
    %c0_i32_1 = arith.constant 0 : i32
    return %arg0, %c0_i32, %c0_i32_0 : i32, i32, i32
  }
  func.func @transform_1(%arg0: i32) -> (i32, i32) {
    %c0_i32 = arith.constant 0 : i32
    %c0_i32_0 = arith.constant 0 : i32
    %c0_i32_1 = arith.constant 0 : i32
    return %c0_i32, %c0_i32_0 : i32, i32
  }
  func.func @transform_2(%arg0: i32) -> (i32, i32) {
    %c0_i32 = arith.constant 0 : i32
    %c0_i32_0 = arith.constant 0 : i32
    %c0_i32_1 = arith.constant 0 : i32
    return %c0_i32, %c0_i32_0 : i32, i32
  }
  func.func @transform_3(%arg0: i32) -> (i32, i32) {
    %c0_i32 = arith.constant 0 : i32
    %c0_i32_0 = arith.constant 0 : i32
    %c0_i32_1 = arith.constant 0 : i32
    return %c0_i32, %c0_i32_0 : i32, i32
  }
  func.func @transform_4(%arg0: i32) -> (i32, i32) {
    %c0_i32 = arith.constant 0 : i32
    %c0_i32_0 = arith.constant 0 : i32
    %c0_i32_1 = arith.constant 0 : i32
    return %c0_i32, %c0_i32_0 : i32, i32
  }
  func.func @transform_5(%arg0: i32) -> (i32, i32) {
    %c0_i32 = arith.constant 0 : i32
    %c0_i32_0 = arith.constant 0 : i32
    %c0_i32_1 = arith.constant 0 : i32
    return %c0_i32, %c0_i32_0 : i32, i32
  }
  func.func @transform_6(%arg0: i32) -> (i32, i32) {
    %c0_i32 = arith.constant 0 : i32
    %c0_i32_0 = arith.constant 0 : i32
    %c0_i32_1 = arith.constant 0 : i32
    return %c0_i32, %c0_i32_0 : i32, i32
  }
  func.func @transform_7(%arg0: i32) -> (i32, i32) {
    %c0_i32 = arith.constant 0 : i32
    %c0_i32_0 = arith.constant 0 : i32
    %c0_i32_1 = arith.constant 0 : i32
    return %c0_i32, %c0_i32_0 : i32, i32
  }
  func.func @transform_8(%arg0: i32) -> (i32, i32) {
    %c0_i32 = arith.constant 0 : i32
    %c0_i32_0 = arith.constant 0 : i32
    %c0_i32_1 = arith.constant 0 : i32
    return %c0_i32, %c0_i32_0 : i32, i32
  }
  func.func @transform_9(%arg0: i32) -> (i32, i32, i32) {
    %c0_i32 = arith.constant 0 : i32
    %c0_i32_0 = arith.constant 0 : i32
    %c0_i32_1 = arith.constant 0 : i32
    return %arg0, %c0_i32, %c0_i32_0 : i32, i32, i32
  }
}

</mosaic_0001>

<llo_original>
// kernel: _lambda_.1
$region0: #{_lambda_.1}
  #allocation0 [shape = 'u32[]', space=smem, size = 0x4, offset = 0x4, fixed_abs, tag = 'smem constant byte address 0x4 - core index']
  #allocation1 [shape = 'u32[144,128]{1,0:T(1,128)}', space=vmem, size = 0x12000, scoped, tag = 'internal scratch']
  %s0 = inlined_call_operand.vmem [shape: bf16[2,32,256], index: 0, kind: input, shape index: {}]
  %s1 = inlined_call_operand.vmem [shape: bf16[256,32], index: 1, kind: input, shape index: {}]
  %s2 = inlined_call_operand.vmem [shape: f32[256,1], index: 2, kind: input, shape index: {}]
  %s3 = inlined_call_operand.vmem [shape: bf16[64,256], index: 3, kind: input, shape index: {}]
  %s4 = inlined_call_operand.vmem [shape: f32[64,1], index: 4, kind: input, shape index: {}]
  %s5 = inlined_call_operand.vmem [shape: bf16[8,64], index: 5, kind: input, shape index: {}]
  %s6 = inlined_call_operand.vmem [shape: f32[8,1], index: 6, kind: input, shape index: {}]
  %s7 = inlined_call_operand.vmem [shape: bf16[8,64], index: 7, kind: input, shape index: {}]
  %s8 = inlined_call_operand.vmem [shape: bf16[64,8], index: 8, kind: input, shape index: {}]
  %s9 = inlined_call_operand.vmem [shape: f32[2,8,256], index: 9, kind: output, shape index: {}]
  %s10 = sld [smem:[#allocation0]]
  $region69: #{_lambda_.1} parent=0
    _
  %s12 = ssub.s32 1, %s10
  %s13 = scalar_select 0, %s12, %s10
  loop: start=0, step=1, limit=4
  $region2: #{_lambda_.1} parent=0 // loop_pre_header
    _
  $region3: #{_lambda_.1} parent=0 // loop_header
    %s15 = sphi 0, %s19
    %p16 = scmp.ge.s32.totalorder %s15, 4
    %s25 = sphi 0, %s27
    %s28 = sphi 0, %s25
    %s29 = sphi 0, %s28
    %s45 = sphi 0, %s29
    %s49 = sphi 0, %s49
    %s51 = sphi 0, %s49
    %s52 = sphi 0, %s51
    %s66 = sphi 0, %s52
    %s70 = sphi 0, %s70
    %s72 = sphi 0, %s70
    %s73 = sphi 0, %s72
    %s87 = sphi 0, %s73
    %s91 = sphi 0, %s91
    %s93 = sphi 0, %s91
    %s94 = sphi 0, %s93
    %s108 = sphi 0, %s94
    %s112 = sphi 0, %s112
    %s114 = sphi 0, %s112
    %s115 = sphi 0, %s114
    %s129 = sphi 0, %s115
    %s133 = sphi 0, %s133
    %s135 = sphi 0, %s133
    %s136 = sphi 0, %s135
    %s150 = sphi 0, %s136
    %s154 = sphi 0, %s154
    %s156 = sphi 0, %s154
    %s157 = sphi 0, %s156
    %s171 = sphi 0, %s157
    %s175 = sphi 0, %s175
    %s177 = sphi 0, %s175
    %s178 = sphi 0, %s177
    %s192 = sphi 0, %s178
    %s196 = sphi 0, %s196
    %s198 = sphi 0, %s196
    %s199 = sphi 0, %s198
    %s213 = sphi 0, %s199
    %s219 = sphi 0, %s221
    %s222 = sphi 0, %s219
    %s223 = sphi 0, %s222
    %s239 = sphi 0, %s223
  $region4: #{_lambda_.1} parent=0 // loop_header_branch
    %18 = sbr.rel (%p16) target = $region8
  $region5: #{_lambda_.1} parent=0 // loop_body
    %s20 = ssub.s32 %s15, 1
    %s21 = ssub.s32 %s15, 2
    %s22 = sadd.s32 %s15, 1
    %s23 = ssub.s32 %s15, %s22
    %p24 = scmp.eq.s32.totalorder %s23, 0
    %s26 = sadd.s32 %s25, 1
    %s27 = scalar_select %p24, %s25, %s26
    %p30 = pneg %p24
    %p31 = scmp.eq.s32.totalorder %s15, 1
    %p32 = por %p30, %p31
    %p33 = scmp.ne.s32.totalorder %s25, %s28
    %p34 = scmp.eq.s32.totalorder %s15, 0
    %p35 = por %p33, %p34
    %p36 = scmp.ne.s32.totalorder %s25, %s28
    %p37 = scmp.eq.s32.totalorder %s20, 1
    %p38 = por %p36, %p37
    %p39 = scmp.ne.s32.totalorder %s28, %s29
    %p40 = scmp.eq.s32.totalorder %s20, 0
    %p41 = por %p39, %p40
    %p42 = scmp.ne.s32.totalorder %s28, %s29
    %p43 = scmp.eq.s32.totalorder %s21, 1
    %p44 = por %p42, %p43
    %p46 = scmp.ne.s32.totalorder %s29, %s45
    %p47 = scmp.eq.s32.totalorder %s21, 0
    %p48 = por %p46, %p47
    %s50 = sadd.s32 %s49, 1
    %p53 = scmp.eq.s32.totalorder %s15, 1
    %p54 = scmp.ne.s32.totalorder %s49, %s51
    %p55 = scmp.eq.s32.totalorder %s15, 0
    %p56 = por %p54, %p55
    %p57 = scmp.ne.s32.totalorder %s49, %s51
    %p58 = scmp.eq.s32.totalorder %s20, 1
    %p59 = por %p57, %p58
    %p60 = scmp.ne.s32.totalorder %s51, %s52
    %p61 = scmp.eq.s32.totalorder %s20, 0
    %p62 = por %p60, %p61
    %p63 = scmp.ne.s32.totalorder %s51, %s52
    %p64 = scmp.eq.s32.totalorder %s21, 1
    %p65 = por %p63, %p64
    %p67 = scmp.ne.s32.totalorder %s52, %s66
    %p68 = scmp.eq.s32.totalorder %s21, 0
    %p69 = por %p67, %p68
    %s71 = sadd.s32 %s70, 1
    %p74 = scmp.eq.s32.totalorder %s15, 1
    %p75 = scmp.ne.s32.totalorder %s70, %s72
    %p76 = scmp.eq.s32.totalorder %s15, 0
    %p77 = por %p75, %p76
    %p78 = scmp.ne.s32.totalorder %s70, %s72
    %p79 = scmp.eq.s32.totalorder %s20, 1
    %p80 = por %p78, %p79
    %p81 = scmp.ne.s32.totalorder %s72, %s73
    %p82 = scmp.eq.s32.totalorder %s20, 0
    %p83 = por %p81, %p82
    %p84 = scmp.ne.s32.totalorder %s72, %s73
    %p85 = scmp.eq.s32.totalorder %s21, 1
    %p86 = por %p84, %p85
    %p88 = scmp.ne.s32.totalorder %s73, %s87
    %p89 = scmp.eq.s32.totalorder %s21, 0
    %p90 = por %p88, %p89
    %s92 = sadd.s32 %s91, 1
    %p95 = scmp.eq.s32.totalorder %s15, 1
    %p96 = scmp.ne.s32.totalorder %s91, %s93
    %p97 = scmp.eq.s32.totalorder %s15, 0
    %p98 = por %p96, %p97
    %p99 = scmp.ne.s32.totalorder %s91, %s93
    %p100 = scmp.eq.s32.totalorder %s20, 1
    %p101 = por %p99, %p100
    %p102 = scmp.ne.s32.totalorder %s93, %s94
    %p103 = scmp.eq.s32.totalorder %s20, 0
    %p104 = por %p102, %p103
    %p105 = scmp.ne.s32.totalorder %s93, %s94
    %p106 = scmp.eq.s32.totalorder %s21, 1
    %p107 = por %p105, %p106
    %p109 = scmp.ne.s32.totalorder %s94, %s108
    %p110 = scmp.eq.s32.totalorder %s21, 0
    %p111 = por %p109, %p110
    %s113 = sadd.s32 %s112, 1
    %p116 = scmp.eq.s32.totalorder %s15, 1
    %p117 = scmp.ne.s32.totalorder %s112, %s114
    %p118 = scmp.eq.s32.totalorder %s15, 0
    %p119 = por %p117, %p118
    %p120 = scmp.ne.s32.totalorder %s112, %s114
    %p121 = scmp.eq.s32.totalorder %s20, 1
    %p122 = por %p120, %p121
    %p123 = scmp.ne.s32.totalorder %s114, %s115
    %p124 = scmp.eq.s32.totalorder %s20, 0
    %p125 = por %p123, %p124
    %p126 = scmp.ne.s32.totalorder %s114, %s115
    %p127 = scmp.eq.s32.totalorder %s21, 1
    %p128 = por %p126, %p127
    %p130 = scmp.ne.s32.totalorder %s115, %s129
    %p131 = scmp.eq.s32.totalorder %s21, 0
    %p132 = por %p130, %p131
    %s134 = sadd.s32 %s133, 1
    %p137 = scmp.eq.s32.totalorder %s15, 1
    %p138 = scmp.ne.s32.totalorder %s133, %s135
    %p139 = scmp.eq.s32.totalorder %s15, 0
    %p140 = por %p138, %p139
    %p141 = scmp.ne.s32.totalorder %s133, %s135
    %p142 = scmp.eq.s32.totalorder %s20, 1
    %p143 = por %p141, %p142
    %p144 = scmp.ne.s32.totalorder %s135, %s136
    %p145 = scmp.eq.s32.totalorder %s20, 0
    %p146 = por %p144, %p145
    %p147 = scmp.ne.s32.totalorder %s135, %s136
    %p148 = scmp.eq.s32.totalorder %s21, 1
    %p149 = por %p147, %p148
    %p151 = scmp.ne.s32.totalorder %s136, %s150
    %p152 = scmp.eq.s32.totalorder %s21, 0
    %p153 = por %p151, %p152
    %s155 = sadd.s32 %s154, 1
    %p158 = scmp.eq.s32.totalorder %s15, 1
    %p159 = scmp.ne.s32.totalorder %s154, %s156
    %p160 = scmp.eq.s32.totalorder %s15, 0
    %p161 = por %p159, %p160
    %p162 = scmp.ne.s32.totalorder %s154, %s156
    %p163 = scmp.eq.s32.totalorder %s20, 1
    %p164 = por %p162, %p163
    %p165 = scmp.ne.s32.totalorder %s156, %s157
    %p166 = scmp.eq.s32.totalorder %s20, 0
    %p167 = por %p165, %p166
    %p168 = scmp.ne.s32.totalorder %s156, %s157
    %p169 = scmp.eq.s32.totalorder %s21, 1
    %p170 = por %p168, %p169
    %p172 = scmp.ne.s32.totalorder %s157, %s171
    %p173 = scmp.eq.s32.totalorder %s21, 0
    %p174 = por %p172, %p173
    %s176 = sadd.s32 %s175, 1
    %p179 = scmp.eq.s32.totalorder %s15, 1
    %p180 = scmp.ne.s32.totalorder %s175, %s177
    %p181 = scmp.eq.s32.totalorder %s15, 0
    %p182 = por %p180, %p181
    %p183 = scmp.ne.s32.totalorder %s175, %s177
    %p184 = scmp.eq.s32.totalorder %s20, 1
    %p185 = por %p183, %p184
    %p186 = scmp.ne.s32.totalorder %s177, %s178
    %p187 = scmp.eq.s32.totalorder %s20, 0
    %p188 = por %p186, %p187
    %p189 = scmp.ne.s32.totalorder %s177, %s178
    %p190 = scmp.eq.s32.totalorder %s21, 1
    %p191 = por %p189, %p190
    %p193 = scmp.ne.s32.totalorder %s178, %s192
    %p194 = scmp.eq.s32.totalorder %s21, 0
    %p195 = por %p193, %p194
    %s197 = sadd.s32 %s196, 1
    %p200 = scmp.eq.s32.totalorder %s15, 1
    %p201 = scmp.ne.s32.totalorder %s196, %s198
    %p202 = scmp.eq.s32.totalorder %s15, 0
    %p203 = por %p201, %p202
    %p204 = scmp.ne.s32.totalorder %s196, %s198
    %p205 = scmp.eq.s32.totalorder %s20, 1
    %p206 = por %p204, %p205
    %p207 = scmp.ne.s32.totalorder %s198, %s199
    %p208 = scmp.eq.s32.totalorder %s20, 0
    %p209 = por %p207, %p208
    %p210 = scmp.ne.s32.totalorder %s198, %s199
    %p211 = scmp.eq.s32.totalorder %s21, 1
    %p212 = por %p210, %p211
    %p214 = scmp.ne.s32.totalorder %s199, %s213
    %p215 = scmp.eq.s32.totalorder %s21, 0
    %p216 = por %p214, %p215
    %s217 = ssub.s32 %s15, %s22
    %p218 = scmp.eq.s32.totalorder %s217, 0
    %s220 = sadd.s32 %s219, 1
    %s221 = scalar_select %p218, %s219, %s220
    %p224 = pneg %p218
    %p225 = scmp.eq.s32.totalorder %s15, 1
    %p226 = por %p224, %p225
    %p227 = scmp.ne.s32.totalorder %s219, %s222
    %p228 = scmp.eq.s32.totalorder %s15, 0
    %p229 = por %p227, %p228
    %p230 = scmp.ne.s32.totalorder %s219, %s222
    %p231 = scmp.eq.s32.totalorder %s20, 1
    %p232 = por %p230, %p231
    %p233 = scmp.ne.s32.totalorder %s222, %s223
    %p234 = scmp.eq.s32.totalorder %s20, 0
    %p235 = por %p233, %p234
    %p236 = scmp.ne.s32.totalorder %s222, %s223
    %p237 = scmp.eq.s32.totalorder %s21, 1
    %p238 = por %p236, %p237
    %p240 = scmp.ne.s32.totalorder %s223, %s239
    %p241 = scmp.eq.s32.totalorder %s21, 0
    %p242 = por %p240, %p241
    %p243 = scmp.le.s32.totalorder 1, %s15
    %p244 = scmp.lt.s32.totalorder %s15, 3
    %p245 = pnand %p243, %p244
    %p246 = pneg %p245
    // Predicated region
    $region9: #{_lambda_.1} parent=5 // pred_check
      _
    $region10: #{_lambda_.1} parent=5 // pred_check_branch
      %248 = sbr.rel (%p245) target = $region12
    $region11: #{_lambda_.1} parent=5 // pred_region
      %s249 = ssub.s32 %s15, 1
      // Predicated region
      $region13: #{_lambda_.1} parent=11 // pred_check
        %p250 = pneg %p62
      $region14: #{_lambda_.1} parent=11 // pred_check_branch
        %252 = sbr.rel (%p250) target = $region16
      $region15: #{_lambda_.1} parent=11 // pred_region
        _
      $region16: #{_lambda_.1} parent=11 // pred_fallthru
        _
      // Predicated region
      $region17: #{_lambda_.1} parent=11 // pred_check
        %p253 = pneg %p83
      $region18: #{_lambda_.1} parent=11 // pred_check_branch
        %255 = sbr.rel (%p253) target = $region20
      $region19: #{_lambda_.1} parent=11 // pred_region
        _
      $region20: #{_lambda_.1} parent=11 // pred_fallthru
        _
      // Predicated region
      $region21: #{_lambda_.1} parent=11 // pred_check
        %p256 = pneg %p104
      $region22: #{_lambda_.1} parent=11 // pred_check_branch
        %258 = sbr.rel (%p256) target = $region24
      $region23: #{_lambda_.1} parent=11 // pred_region
        _
      $region24: #{_lambda_.1} parent=11 // pred_fallthru
        _
      // Predicated region
      $region25: #{_lambda_.1} parent=11 // pred_check
        %p259 = pneg %p125
      $region26: #{_lambda_.1} parent=11 // pred_check_branch
        %261 = sbr.rel (%p259) target = $region28
      $region27: #{_lambda_.1} parent=11 // pred_region
        _
      $region28: #{_lambda_.1} parent=11 // pred_fallthru
        _
      // Predicated region
      $region29: #{_lambda_.1} parent=11 // pred_check
        %p262 = pneg %p146
      $region30: #{_lambda_.1} parent=11 // pred_check_branch
        %264 = sbr.rel (%p262) target = $region32
      $region31: #{_lambda_.1} parent=11 // pred_region
        _
      $region32: #{_lambda_.1} parent=11 // pred_fallthru
        _
      // Predicated region
      $region33: #{_lambda_.1} parent=11 // pred_check
        %p265 = pneg %p167
      $region34: #{_lambda_.1} parent=11 // pred_check_branch
        %267 = sbr.rel (%p265) target = $region36
      $region35: #{_lambda_.1} parent=11 // pred_region
        _
      $region36: #{_lambda_.1} parent=11 // pred_fallthru
        _
      // Predicated region
      $region37: #{_lambda_.1} parent=11 // pred_check
        %p268 = pneg %p188
      $region38: #{_lambda_.1} parent=11 // pred_check_branch
        %270 = sbr.rel (%p268) target = $region40
      $region39: #{_lambda_.1} parent=11 // pred_region
        _
      $region40: #{_lambda_.1} parent=11 // pred_fallthru
        _
      // Predicated region
      $region41: #{_lambda_.1} parent=11 // pred_check
        %p271 = pneg %p209
      $region42: #{_lambda_.1} parent=11 // pred_check_branch
        %273 = sbr.rel (%p271) target = $region44
      $region43: #{_lambda_.1} parent=11 // pred_region
        _
      $region44: #{_lambda_.1} parent=11 // pred_fallthru
        _
    $region12: #{_lambda_.1} parent=5 // pred_fallthru
      _
    %p274 = scmp.lt.s32.totalorder %s15, 2
    // Predicated region
    $region45: #{_lambda_.1} parent=5 // pred_check
      %p275 = pneg %p274
    $region46: #{_lambda_.1} parent=5 // pred_check_branch
      %277 = sbr.rel (%p275) target = $region48
    $region47: #{_lambda_.1} parent=5 // pred_region
      // Predicated region
      $region49: #{_lambda_.1} parent=47 // pred_check
        %p278 = pneg %p35
      $region50: #{_lambda_.1} parent=47 // pred_check_branch
        %280 = sbr.rel (%p278) target = $region52
      $region51: #{_lambda_.1} parent=47 // pred_region
        %p281 = scmp.lt.s32.totalorder %s15, 1
        %s282 = scalar_select %p281, %s15, 1
        %s283 = smul.addr %s282, 8
        %s284 = smul.addr %s283, 4
        %s285 = scalar_lea.vmem %s0, %s284
      $region52: #{_lambda_.1} parent=47 // pred_fallthru
        _
    $region48: #{_lambda_.1} parent=5 // pred_fallthru
      _
    %p286 = scmp.le.s32.totalorder 1, %s15
    %p287 = scmp.lt.s32.totalorder %s15, 3
    %p288 = pnand %p286, %p287
    %p289 = pneg %p288
    // Predicated region
    $region53: #{_lambda_.1} parent=5 // pred_check
      _
    $region54: #{_lambda_.1} parent=5 // pred_check_branch
      %291 = sbr.rel (%p288) target = $region56
    $region55: #{_lambda_.1} parent=5 // pred_region
      %s292 = ssub.s32 %s15, 1
      %p293 = scmp.lt.s32.totalorder %s20, 1
      %s294 = scalar_select %p293, %s20, 1
      %s295 = smul.addr %s294, 8
      %s296 = smul.addr %s295, 4
      %s297 = scalar_lea.vmem %s0, %s296
      %p298 = pneg %p41
      %p299 = pneg %p38
      %p300 = pneg %p62
      %p301 = pneg %p59
      %p302 = pneg %p83
      %p303 = pneg %p80
      %p304 = pneg %p104
      %p305 = pneg %p101
      %p306 = pneg %p125
      %p307 = pneg %p122
      %p308 = pneg %p146
      %p309 = pneg %p143
      %p310 = pneg %p167
      %p311 = pneg %p164
      %p312 = pneg %p188
      %p313 = pneg %p185
      %p314 = pneg %p209
      %p315 = pneg %p206
      %p316 = pneg %p235
      %p317 = pneg %p232
      %p318 = scmp.lt.s32.totalorder %s20, 1
      %s319 = scalar_select %p318, %s20, 1
      %s320 = smul.addr %s319, 2
      %s321 = smul.addr %s320, 8
      %s322 = scalar_lea.vmem %s9, %s321
      %p323 = scmp.lt.s32.totalorder %s20, 1
      %s324 = scalar_select %p323, %s20, 1
      %s325 = smul.addr %s324, 8
      %s326 = smul.addr %s325, 4
      %s327 = scalar_lea.vmem %s0, %s326
      %p328 = scmp.lt.s32.totalorder %s20, 1
      %s329 = scalar_select %p328, %s20, 1
      %s330 = smul.addr %s329, 2
      %s331 = smul.addr %s330, 8
      %s332 = scalar_lea.vmem %s9, %s331
      %v334 = vld [vmem:[%s1] sm:$0xf]
      %v335 = vld [vmem:[%s1 + $0x4] sm:$0xf]
      %v336 = vld [vmem:[%s1 + $0x8] sm:$0xf]
      %v337 = vld [vmem:[%s1 + $0xc] sm:$0xf]
      %v338 = vld [vmem:[%s1 + $0x10] sm:$0xf]
      %v339 = vld [vmem:[%s1 + $0x14] sm:$0xf]
      %v340 = vld [vmem:[%s1 + $0x18] sm:$0xf]
      %v341 = vld [vmem:[%s1 + $0x1c] sm:$0xf]
      %v342 = vld [vmem:[%s1 + $0x20] sm:$0xf]
      %v343 = vld [vmem:[%s1 + $0x24] sm:$0xf]
      %v344 = vld [vmem:[%s1 + $0x28] sm:$0xf]
      %v345 = vld [vmem:[%s1 + $0x2c] sm:$0xf]
      %v346 = vld [vmem:[%s1 + $0x30] sm:$0xf]
      %v347 = vld [vmem:[%s1 + $0x34] sm:$0xf]
      %v348 = vld [vmem:[%s1 + $0x38] sm:$0xf]
      %v349 = vld [vmem:[%s1 + $0x3c] sm:$0xf]
      %v350 = vld [vmem:[%s1 + $0x40] sm:$0xf]
      %v351 = vld [vmem:[%s1 + $0x44] sm:$0xf]
      %v352 = vld [vmem:[%s1 + $0x48] sm:$0xf]
      %v353 = vld [vmem:[%s1 + $0x4c] sm:$0xf]
      %v354 = vld [vmem:[%s1 + $0x50] sm:$0xf]
      %v355 = vld [vmem:[%s1 + $0x54] sm:$0xf]
      %v356 = vld [vmem:[%s1 + $0x58] sm:$0xf]
      %v357 = vld [vmem:[%s1 + $0x5c] sm:$0xf]
      %v358 = vld [vmem:[%s1 + $0x60] sm:$0xf]
      %v359 = vld [vmem:[%s1 + $0x64] sm:$0xf]
      %v360 = vld [vmem:[%s1 + $0x68] sm:$0xf]
      %v361 = vld [vmem:[%s1 + $0x6c] sm:$0xf]
      %v362 = vld [vmem:[%s1 + $0x70] sm:$0xf]
      %v363 = vld [vmem:[%s1 + $0x74] sm:$0xf]
      %v364 = vld [vmem:[%s1 + $0x78] sm:$0xf]
      %v365 = vld [vmem:[%s1 + $0x7c] sm:$0xf]
      %v366 = vld [vmem:[%s327] sm:$0xff]
      %v367 = vld [vmem:[%s327 + $0x8] sm:$0xff]
      %v368 = vld [vmem:[%s327 + $0x10] sm:$0xff]
      %v369 = vld [vmem:[%s327 + $0x18] sm:$0xff]
      %v370 = vld [vmem:[%s2] sm:$0xff]
      %v371 = vld [vmem:[%s2 + $0x8] sm:$0xff]
      %v372 = vld [vmem:[%s2 + $0x10] sm:$0xff]
      %v373 = vld [vmem:[%s2 + $0x18] sm:$0xff]
      %v374 = vld [vmem:[%s2 + $0x20] sm:$0xff]
      %v375 = vld [vmem:[%s2 + $0x28] sm:$0xff]
      %v376 = vld [vmem:[%s2 + $0x30] sm:$0xff]
      %v377 = vld [vmem:[%s2 + $0x38] sm:$0xff]
      %v378 = vld [vmem:[%s2 + $0x40] sm:$0xff]
      %v379 = vld [vmem:[%s2 + $0x48] sm:$0xff]
      %v380 = vld [vmem:[%s2 + $0x50] sm:$0xff]
      %v381 = vld [vmem:[%s2 + $0x58] sm:$0xff]
      %v382 = vld [vmem:[%s2 + $0x60] sm:$0xff]
      %v383 = vld [vmem:[%s2 + $0x68] sm:$0xff]
      %v384 = vld [vmem:[%s2 + $0x70] sm:$0xff]
      %v385 = vld [vmem:[%s2 + $0x78] sm:$0xff]
      %v386 = vld [vmem:[%s2 + $0x80] sm:$0xff]
      %v387 = vld [vmem:[%s2 + $0x88] sm:$0xff]
      %v388 = vld [vmem:[%s2 + $0x90] sm:$0xff]
      %v389 = vld [vmem:[%s2 + $0x98] sm:$0xff]
      %v390 = vld [vmem:[%s2 + $0xa0] sm:$0xff]
      %v391 = vld [vmem:[%s2 + $0xa8] sm:$0xff]
      %v392 = vld [vmem:[%s2 + $0xb0] sm:$0xff]
      %v393 = vld [vmem:[%s2 + $0xb8] sm:$0xff]
      %v394 = vld [vmem:[%s2 + $0xc0] sm:$0xff]
      %v395 = vld [vmem:[%s2 + $0xc8] sm:$0xff]
      %v396 = vld [vmem:[%s2 + $0xd0] sm:$0xff]
      %v397 = vld [vmem:[%s2 + $0xd8] sm:$0xff]
      %v398 = vld [vmem:[%s2 + $0xe0] sm:$0xff]
      %v399 = vld [vmem:[%s2 + $0xe8] sm:$0xff]
      %v400 = vld [vmem:[%s2 + $0xf0] sm:$0xff]
      %v401 = vld [vmem:[%s2 + $0xf8] sm:$0xff]
      %403 = vset.pattern.permute.xlu0 0
      %404 = vperm.xlu0 %403, %v370
      %v405 = vpop.permute.xlu0 %404
      %408 = vset.pattern.permute.xlu0 0
      %409 = vperm.xlu0 %408, %v371
      %v410 = vpop.permute.xlu0 %409
      %413 = vset.pattern.permute.xlu0 0
      %414 = vperm.xlu0 %413, %v372
      %v415 = vpop.permute.xlu0 %414
      %418 = vset.pattern.permute.xlu0 0
      %419 = vperm.xlu0 %418, %v373
      %v420 = vpop.permute.xlu0 %419
      %423 = vset.pattern.permute.xlu0 0
      %424 = vperm.xlu0 %423, %v374
      %v425 = vpop.permute.xlu0 %424
      %428 = vset.pattern.permute.xlu0 0
      %429 = vperm.xlu0 %428, %v375
      %v430 = vpop.permute.xlu0 %429
      %433 = vset.pattern.permute.xlu0 0
      %434 = vperm.xlu0 %433, %v376
      %v435 = vpop.permute.xlu0 %434
      %438 = vset.pattern.permute.xlu0 0
      %439 = vperm.xlu0 %438, %v377
      %v440 = vpop.permute.xlu0 %439
      %443 = vset.pattern.permute.xlu0 0
      %444 = vperm.xlu0 %443, %v378
      %v445 = vpop.permute.xlu0 %444
      %448 = vset.pattern.permute.xlu0 0
      %449 = vperm.xlu0 %448, %v379
      %v450 = vpop.permute.xlu0 %449
      %453 = vset.pattern.permute.xlu0 0
      %454 = vperm.xlu0 %453, %v380
      %v455 = vpop.permute.xlu0 %454
      %458 = vset.pattern.permute.xlu0 0
      %459 = vperm.xlu0 %458, %v381
      %v460 = vpop.permute.xlu0 %459
      %463 = vset.pattern.permute.xlu0 0
      %464 = vperm.xlu0 %463, %v382
      %v465 = vpop.permute.xlu0 %464
      %468 = vset.pattern.permute.xlu0 0
      %469 = vperm.xlu0 %468, %v383
      %v470 = vpop.permute.xlu0 %469
      %473 = vset.pattern.permute.xlu0 0
      %474 = vperm.xlu0 %473, %v384
      %v475 = vpop.permute.xlu0 %474
      %478 = vset.pattern.permute.xlu0 0
      %479 = vperm.xlu0 %478, %v385
      %v480 = vpop.permute.xlu0 %479
      %483 = vset.pattern.permute.xlu0 0
      %484 = vperm.xlu0 %483, %v386
      %v485 = vpop.permute.xlu0 %484
      %488 = vset.pattern.permute.xlu0 0
      %489 = vperm.xlu0 %488, %v387
      %v490 = vpop.permute.xlu0 %489
      %493 = vset.pattern.permute.xlu0 0
      %494 = vperm.xlu0 %493, %v388
      %v495 = vpop.permute.xlu0 %494
      %498 = vset.pattern.permute.xlu0 0
      %499 = vperm.xlu0 %498, %v389
      %v500 = vpop.permute.xlu0 %499
      %503 = vset.pattern.permute.xlu0 0
      %504 = vperm.xlu0 %503, %v390
      %v505 = vpop.permute.xlu0 %504
      %508 = vset.pattern.permute.xlu0 0
      %509 = vperm.xlu0 %508, %v391
      %v510 = vpop.permute.xlu0 %509
      %513 = vset.pattern.permute.xlu0 0
      %514 = vperm.xlu0 %513, %v392
      %v515 = vpop.permute.xlu0 %514
      %518 = vset.pattern.permute.xlu0 0
      %519 = vperm.xlu0 %518, %v393
      %v520 = vpop.permute.xlu0 %519
      %523 = vset.pattern.permute.xlu0 0
      %524 = vperm.xlu0 %523, %v394
      %v525 = vpop.permute.xlu0 %524
      %528 = vset.pattern.permute.xlu0 0
      %529 = vperm.xlu0 %528, %v395
      %v530 = vpop.permute.xlu0 %529
      %533 = vset.pattern.permute.xlu0 0
      %534 = vperm.xlu0 %533, %v396
      %v535 = vpop.permute.xlu0 %534
      %538 = vset.pattern.permute.xlu0 0
      %539 = vperm.xlu0 %538, %v397
      %v540 = vpop.permute.xlu0 %539
      %543 = vset.pattern.permute.xlu0 0
      %544 = vperm.xlu0 %543, %v398
      %v545 = vpop.permute.xlu0 %544
      %548 = vset.pattern.permute.xlu0 0
      %549 = vperm.xlu0 %548, %v399
      %v550 = vpop.permute.xlu0 %549
      %553 = vset.pattern.permute.xlu0 0
      %554 = vperm.xlu0 %553, %v400
      %v555 = vpop.permute.xlu0 %554
      %558 = vset.pattern.permute.xlu0 0
      %559 = vperm.xlu0 %558, %v401
      %v560 = vpop.permute.xlu0 %559
      %v594 = vunpack.c.l.b16 %v334
      %v595 = vunpack.c.l.b16 %v335
      %v596 = vunpack.c.l.b16 %v336
      %v597 = vunpack.c.l.b16 %v337
      %v598 = vunpack.c.l.b16 %v338
      %v599 = vunpack.c.l.b16 %v339
      %v600 = vunpack.c.l.b16 %v340
      %v601 = vunpack.c.l.b16 %v341
      %v602 = vunpack.c.l.b16 %v342
      %v603 = vunpack.c.l.b16 %v343
      %v604 = vunpack.c.l.b16 %v344
      %v605 = vunpack.c.l.b16 %v345
      %v606 = vunpack.c.l.b16 %v346
      %v607 = vunpack.c.l.b16 %v347
      %v608 = vunpack.c.l.b16 %v348
      %v609 = vunpack.c.l.b16 %v349
      %v610 = vunpack.c.l.b16 %v350
      %v611 = vunpack.c.l.b16 %v351
      %v612 = vunpack.c.l.b16 %v352
      %v613 = vunpack.c.l.b16 %v353
      %v614 = vunpack.c.l.b16 %v354
      %v615 = vunpack.c.l.b16 %v355
      %v616 = vunpack.c.l.b16 %v356
      %v617 = vunpack.c.l.b16 %v357
      %v618 = vunpack.c.l.b16 %v358
      %v619 = vunpack.c.l.b16 %v359
      %v620 = vunpack.c.l.b16 %v360
      %v621 = vunpack.c.l.b16 %v361
      %v622 = vunpack.c.l.b16 %v362
      %v623 = vunpack.c.l.b16 %v363
      %v624 = vunpack.c.l.b16 %v364
      %v625 = vunpack.c.l.b16 %v365
      %v626 = vpack.c.b16 %v595, %v594
      %v627 = vpack.c.b16 %v597, %v596
      %v628 = vpack.c.b16 %v599, %v598
      %v629 = vpack.c.b16 %v601, %v600
      %v630 = vpack.c.b16 %v603, %v602
      %v631 = vpack.c.b16 %v605, %v604
      %v632 = vpack.c.b16 %v607, %v606
      %v633 = vpack.c.b16 %v609, %v608
      %v634 = vpack.c.b16 %v611, %v610
      %v635 = vpack.c.b16 %v613, %v612
      %v636 = vpack.c.b16 %v615, %v614
      %v637 = vpack.c.b16 %v617, %v616
      %v638 = vpack.c.b16 %v619, %v618
      %v639 = vpack.c.b16 %v621, %v620
      %v640 = vpack.c.b16 %v623, %v622
      %v641 = vpack.c.b16 %v625, %v624
      %v646 = vunpack.c.l.b16 %v366
      %v647 = vunpack.c.h.b16 %v366
      %v648 = vunpack.c.l.b16 %v367
      %v649 = vunpack.c.h.b16 %v367
      %v650 = vunpack.c.l.b16 %v368
      %v651 = vunpack.c.h.b16 %v368
      %v652 = vunpack.c.l.b16 %v369
      %v653 = vunpack.c.h.b16 %v369
      %v654 = vpack.c.b16 %v648, %v646
      %v655 = vpack.c.b16 %v649, %v647
      %v656 = vpack.c.b16 %v652, %v650
      %v657 = vpack.c.b16 %v653, %v651
      %vm662 = vcmask 261120
      %v664 = vsel %vm662, %v626, 0
      %v667 = vsel %vm662, %v627, 0
      %v670 = vsel %vm662, %v628, 0
      %v673 = vsel %vm662, %v629, 0
      %v676 = vsel %vm662, %v630, 0
      %v679 = vsel %vm662, %v631, 0
      %v682 = vsel %vm662, %v632, 0
      %v685 = vsel %vm662, %v633, 0
      %v688 = vsel %vm662, %v634, 0
      %v691 = vsel %vm662, %v635, 0
      %v694 = vsel %vm662, %v636, 0
      %v697 = vsel %vm662, %v637, 0
      %v700 = vsel %vm662, %v638, 0
      %v703 = vsel %vm662, %v639, 0
      %v706 = vsel %vm662, %v640, 0
      %v709 = vsel %vm662, %v641, 0
      %711 = vmatprep.subr.bf16.mxu0 %v655
      %712 = vmatpush1.bf16.msra.mxu0 %v654
      %713 = vmatprep.subr.bf16.mxu0 %v657
      %714 = vmatpush1.bf16.msra.mxu0 %v656
      %715 = vmatprep.subr.bf16.mxu0 0
      %716 = vmatpush1.bf16.msra.mxu0 0
      %717 = vmatprep.subr.bf16.mxu0 0
      %718 = vmatpush1.bf16.msra.mxu0 0
      %719 = vmatprep.subr.bf16.mxu0 0
      %720 = vmatpush1.bf16.msra.mxu0 0
      %721 = vmatprep.subr.bf16.mxu0 0
      %722 = vmatpush1.bf16.msra.mxu0 0
      %723 = vmatprep.subr.bf16.mxu0 0
      %724 = vmatpush1.bf16.msra.mxu0 0
      %725 = vmatprep.subr.bf16.mxu0 0
      %726 = vmatpush1.bf16.msra.mxu0 0
      %727 = vmatprep.subr.bf16.mxu0 0
      %728 = vmatpush1.bf16.msra.mxu0 0
      %729 = vmatprep.subr.bf16.mxu0 0
      %730 = vmatpush1.bf16.msra.mxu0 0
      %731 = vmatprep.subr.bf16.mxu0 0
      %732 = vmatpush1.bf16.msra.mxu0 0
      %733 = vmatprep.subr.bf16.mxu0 0
      %734 = vmatpush1.bf16.msra.mxu0 0
      %735 = vmatprep.subr.bf16.mxu0 0
      %736 = vmatpush1.bf16.msra.mxu0 0
      %737 = vmatprep.subr.bf16.mxu0 0
      %738 = vmatpush1.bf16.msra.mxu0 0
      %739 = vmatprep.subr.bf16.mxu0 0
      %740 = vmatpush1.bf16.msra.mxu0 0
      %741 = vmatprep.subr.bf16.mxu0 0
      %742 = vmatpush1.bf16.msra.mxu0 0
      %743 = vmatprep.mubr.bf16.mxu0 0
      %744 = vmatmul.mubr.bf16.gmra.mrb[0].mxu0 %v664
      %v745 = vpop.f32.mrb[0].mxu0
      %v746 = vadd.f32 %v405, %v745
      %v747 = vpop.f32.mrb[0].mxu0
      %v748 = vadd.f32 %v405, %v747
      %v749 = vpop.f32.mrb[0].mxu0
      %v750 = vadd.f32 %v410, %v749
      %v751 = vpop.f32.mrb[0].mxu0
      %v752 = vadd.f32 %v410, %v751
      %753 = vmatprep.mubr.bf16.mxu0 0
      %754 = vmatmul.mubr.bf16.gmra.mrb[0].mxu0 %v667
      %v755 = vpop.f32.mrb[0].mxu0
      %v756 = vadd.f32 %v415, %v755
      %v757 = vpop.f32.mrb[0].mxu0
      %v758 = vadd.f32 %v415, %v757
      %v759 = vpop.f32.mrb[0].mxu0
      %v760 = vadd.f32 %v420, %v759
      %v761 = vpop.f32.mrb[0].mxu0
      %v762 = vadd.f32 %v420, %v761
      %763 = vmatprep.mubr.bf16.mxu0 0
      %764 = vmatmul.mubr.bf16.gmra.mrb[0].mxu0 %v670
      %v765 = vpop.f32.mrb[0].mxu0
      %v766 = vadd.f32 %v425, %v765
      %v767 = vpop.f32.mrb[0].mxu0
      %v768 = vadd.f32 %v425, %v767
      %v769 = vpop.f32.mrb[0].mxu0
      %v770 = vadd.f32 %v430, %v769
      %v771 = vpop.f32.mrb[0].mxu0
      %v772 = vadd.f32 %v430, %v771
      %773 = vmatprep.mubr.bf16.mxu0 0
      %774 = vmatmul.mubr.bf16.gmra.mrb[0].mxu0 %v673
      %v775 = vpop.f32.mrb[0].mxu0
      %v776 = vadd.f32 %v435, %v775
      %v777 = vpop.f32.mrb[0].mxu0
      %v778 = vadd.f32 %v435, %v777
      %v779 = vpop.f32.mrb[0].mxu0
      %v780 = vadd.f32 %v440, %v779
      %v781 = vpop.f32.mrb[0].mxu0
      %v782 = vadd.f32 %v440, %v781
      %783 = vmatprep.mubr.bf16.mxu0 0
      %784 = vmatmul.mubr.bf16.gmra.mrb[0].mxu0 %v676
      %v785 = vpop.f32.mrb[0].mxu0
      %v786 = vadd.f32 %v445, %v785
      %v787 = vpop.f32.mrb[0].mxu0
      %v788 = vadd.f32 %v445, %v787
      %v789 = vpop.f32.mrb[0].mxu0
      %v790 = vadd.f32 %v450, %v789
      %v791 = vpop.f32.mrb[0].mxu0
      %v792 = vadd.f32 %v450, %v791
      %793 = vmatprep.mubr.bf16.mxu0 0
      %794 = vmatmul.mubr.bf16.gmra.mrb[0].mxu0 %v679
      %v795 = vpop.f32.mrb[0].mxu0
      %v796 = vadd.f32 %v455, %v795
      %v797 = vpop.f32.mrb[0].mxu0
      %v798 = vadd.f32 %v455, %v797
      %v799 = vpop.f32.mrb[0].mxu0
      %v800 = vadd.f32 %v460, %v799
      %v801 = vpop.f32.mrb[0].mxu0
      %v802 = vadd.f32 %v460, %v801
      %803 = vmatprep.mubr.bf16.mxu0 0
      %804 = vmatmul.mubr.bf16.gmra.mrb[0].mxu0 %v682
      %v805 = vpop.f32.mrb[0].mxu0
      %v806 = vadd.f32 %v465, %v805
      %v807 = vpop.f32.mrb[0].mxu0
      %v808 = vadd.f32 %v465, %v807
      %v809 = vpop.f32.mrb[0].mxu0
      %v810 = vadd.f32 %v470, %v809
      %v811 = vpop.f32.mrb[0].mxu0
      %v812 = vadd.f32 %v470, %v811
      %813 = vmatprep.mubr.bf16.mxu0 0
      %814 = vmatmul.mubr.bf16.gmra.mrb[0].mxu0 %v685
      %v815 = vpop.f32.mrb[0].mxu0
      %v816 = vadd.f32 %v475, %v815
      %v817 = vpop.f32.mrb[0].mxu0
      %v818 = vadd.f32 %v475, %v817
      %v819 = vpop.f32.mrb[0].mxu0
      %v820 = vadd.f32 %v480, %v819
      %v821 = vpop.f32.mrb[0].mxu0
      %v822 = vadd.f32 %v480, %v821
      %823 = vmatprep.mubr.bf16.mxu0 0
      %824 = vmatmul.mubr.bf16.gmra.mrb[0].mxu0 %v688
      %v825 = vpop.f32.mrb[0].mxu0
      %v826 = vadd.f32 %v485, %v825
      %v827 = vpop.f32.mrb[0].mxu0
      %v828 = vadd.f32 %v485, %v827
      %v829 = vpop.f32.mrb[0].mxu0
      %v830 = vadd.f32 %v490, %v829
      %v831 = vpop.f32.mrb[0].mxu0
      %v832 = vadd.f32 %v490, %v831
      %833 = vmatprep.mubr.bf16.mxu0 0
      %834 = vmatmul.mubr.bf16.gmra.mrb[0].mxu0 %v691
      %v835 = vpop.f32.mrb[0].mxu0
      %v836 = vadd.f32 %v495, %v835
      %v837 = vpop.f32.mrb[0].mxu0
      %v838 = vadd.f32 %v495, %v837
      %v839 = vpop.f32.mrb[0].mxu0
      %v840 = vadd.f32 %v500, %v839
      %v841 = vpop.f32.mrb[0].mxu0
      %v842 = vadd.f32 %v500, %v841
      %843 = vmatprep.mubr.bf16.mxu0 0
      %844 = vmatmul.mubr.bf16.gmra.mrb[0].mxu0 %v694
      %v845 = vpop.f32.mrb[0].mxu0
      %v846 = vadd.f32 %v505, %v845
      %v847 = vpop.f32.mrb[0].mxu0
      %v848 = vadd.f32 %v505, %v847
      %v849 = vpop.f32.mrb[0].mxu0
      %v850 = vadd.f32 %v510, %v849
      %v851 = vpop.f32.mrb[0].mxu0
      %v852 = vadd.f32 %v510, %v851
      %853 = vmatprep.mubr.bf16.mxu0 0
      %854 = vmatmul.mubr.bf16.gmra.mrb[0].mxu0 %v697
      %v855 = vpop.f32.mrb[0].mxu0
      %v856 = vadd.f32 %v515, %v855
      %v857 = vpop.f32.mrb[0].mxu0
      %v858 = vadd.f32 %v515, %v857
      %v859 = vpop.f32.mrb[0].mxu0
      %v860 = vadd.f32 %v520, %v859
      %v861 = vpop.f32.mrb[0].mxu0
      %v862 = vadd.f32 %v520, %v861
      %863 = vmatprep.mubr.bf16.mxu0 0
      %864 = vmatmul.mubr.bf16.gmra.mrb[0].mxu0 %v700
      %v865 = vpop.f32.mrb[0].mxu0
      %v866 = vadd.f32 %v525, %v865
      %v867 = vpop.f32.mrb[0].mxu0
      %v868 = vadd.f32 %v525, %v867
      %v869 = vpop.f32.mrb[0].mxu0
      %v870 = vadd.f32 %v530, %v869
      %v871 = vpop.f32.mrb[0].mxu0
      %v872 = vadd.f32 %v530, %v871
      %873 = vmatprep.mubr.bf16.mxu0 0
      %874 = vmatmul.mubr.bf16.gmra.mrb[0].mxu0 %v703
      %v875 = vpop.f32.mrb[0].mxu0
      %v876 = vadd.f32 %v535, %v875
      %v877 = vpop.f32.mrb[0].mxu0
      %v878 = vadd.f32 %v535, %v877
      %v879 = vpop.f32.mrb[0].mxu0
      %v880 = vadd.f32 %v540, %v879
      %v881 = vpop.f32.mrb[0].mxu0
      %v882 = vadd.f32 %v540, %v881
      %883 = vmatprep.mubr.bf16.mxu0 0
      %884 = vmatmul.mubr.bf16.gmra.mrb[0].mxu0 %v706
      %v885 = vpop.f32.mrb[0].mxu0
      %v886 = vadd.f32 %v545, %v885
      %v887 = vpop.f32.mrb[0].mxu0
      %v888 = vadd.f32 %v545, %v887
      %v889 = vpop.f32.mrb[0].mxu0
      %v890 = vadd.f32 %v550, %v889
      %v891 = vpop.f32.mrb[0].mxu0
      %v892 = vadd.f32 %v550, %v891
      %893 = vmatprep.mubr.bf16.mxu0 0
      %894 = vmatmul.mubr.bf16.gmra.mrb[0].mxu0 %v709
      %v895 = vpop.f32.mrb[0].mxu0
      %v896 = vadd.f32 %v555, %v895
      %v897 = vpop.f32.mrb[0].mxu0
      %v898 = vadd.f32 %v555, %v897
      %v899 = vpop.f32.mrb[0].mxu0
      %v900 = vadd.f32 %v560, %v899
      %v901 = vpop.f32.mrb[0].mxu0
      %v902 = vadd.f32 %v560, %v901
      %903 = vdwg.mxu0
      %v904 = vmul.f32 %v746, %v746
      %v905 = vmul.f32 %v748, %v748
      %v906 = vmul.f32 %v750, %v750
      %v907 = vmul.f32 %v752, %v752
      %v908 = vmul.f32 %v756, %v756
      %v909 = vmul.f32 %v758, %v758
      %v910 = vmul.f32 %v760, %v760
      %v911 = vmul.f32 %v762, %v762
      %v912 = vmul.f32 %v766, %v766
      %v913 = vmul.f32 %v768, %v768
      %v914 = vmul.f32 %v770, %v770
      %v915 = vmul.f32 %v772, %v772
      %v916 = vmul.f32 %v776, %v776
      %v917 = vmul.f32 %v778, %v778
      %v918 = vmul.f32 %v780, %v780
      %v919 = vmul.f32 %v782, %v782
      %v920 = vmul.f32 %v786, %v786
      %v921 = vmul.f32 %v788, %v788
      %v922 = vmul.f32 %v790, %v790
      %v923 = vmul.f32 %v792, %v792
      %v924 = vmul.f32 %v796, %v796
      %v925 = vmul.f32 %v798, %v798
      %v926 = vmul.f32 %v800, %v800
      %v927 = vmul.f32 %v802, %v802
      %v928 = vmul.f32 %v806, %v806
      %v929 = vmul.f32 %v808, %v808
      %v930 = vmul.f32 %v810, %v810
      %v931 = vmul.f32 %v812, %v812
      %v932 = vmul.f32 %v816, %v816
      %v933 = vmul.f32 %v818, %v818
      %v934 = vmul.f32 %v820, %v820
      %v935 = vmul.f32 %v822, %v822
      %v936 = vmul.f32 %v826, %v826
      %v937 = vmul.f32 %v828, %v828
      %v938 = vmul.f32 %v830, %v830
      %v939 = vmul.f32 %v832, %v832
      %v940 = vmul.f32 %v836, %v836
      %v941 = vmul.f32 %v838, %v838
      %v942 = vmul.f32 %v840, %v840
      %v943 = vmul.f32 %v842, %v842
      %v944 = vmul.f32 %v846, %v846
      %v945 = vmul.f32 %v848, %v848
      %v946 = vmul.f32 %v850, %v850
      %v947 = vmul.f32 %v852, %v852
      %v948 = vmul.f32 %v856, %v856
      %v949 = vmul.f32 %v858, %v858
      %v950 = vmul.f32 %v860, %v860
      %v951 = vmul.f32 %v862, %v862
      %v952 = vmul.f32 %v866, %v866
      %v953 = vmul.f32 %v868, %v868
      %v954 = vmul.f32 %v870, %v870
      %v955 = vmul.f32 %v872, %v872
      %v956 = vmul.f32 %v876, %v876
      %v957 = vmul.f32 %v878, %v878
      %v958 = vmul.f32 %v880, %v880
      %v959 = vmul.f32 %v882, %v882
      %v960 = vmul.f32 %v886, %v886
      %v961 = vmul.f32 %v888, %v888
      %v962 = vmul.f32 %v890, %v890
      %v963 = vmul.f32 %v892, %v892
      %v964 = vmul.f32 %v896, %v896
      %v965 = vmul.f32 %v898, %v898
      %v966 = vmul.f32 %v900, %v900
      %v967 = vmul.f32 %v902, %v902
      %v968 = vmul.f32 %v746, %v904
      %v969 = vmul.f32 %v748, %v905
      %v970 = vmul.f32 %v750, %v906
      %v971 = vmul.f32 %v752, %v907
      %v972 = vmul.f32 %v756, %v908
      %v973 = vmul.f32 %v758, %v909
      %v974 = vmul.f32 %v760, %v910
      %v975 = vmul.f32 %v762, %v911
      %v976 = vmul.f32 %v766, %v912
      %v977 = vmul.f32 %v768, %v913
      %v978 = vmul.f32 %v770, %v914
      %v979 = vmul.f32 %v772, %v915
      %v980 = vmul.f32 %v776, %v916
      %v981 = vmul.f32 %v778, %v917
      %v982 = vmul.f32 %v780, %v918
      %v983 = vmul.f32 %v782, %v919
      %v984 = vmul.f32 %v786, %v920
      %v985 = vmul.f32 %v788, %v921
      %v986 = vmul.f32 %v790, %v922
      %v987 = vmul.f32 %v792, %v923
      %v988 = vmul.f32 %v796, %v924
      %v989 = vmul.f32 %v798, %v925
      %v990 = vmul.f32 %v800, %v926
      %v991 = vmul.f32 %v802, %v927
      %v992 = vmul.f32 %v806, %v928
      %v993 = vmul.f32 %v808, %v929
      %v994 = vmul.f32 %v810, %v930
      %v995 = vmul.f32 %v812, %v931
      %v996 = vmul.f32 %v816, %v932
      %v997 = vmul.f32 %v818, %v933
      %v998 = vmul.f32 %v820, %v934
      %v999 = vmul.f32 %v822, %v935
      %v1000 = vmul.f32 %v826, %v936
      %v1001 = vmul.f32 %v828, %v937
      %v1002 = vmul.f32 %v830, %v938
      %v1003 = vmul.f32 %v832, %v939
      %v1004 = vmul.f32 %v836, %v940
      %v1005 = vmul.f32 %v838, %v941
      %v1006 = vmul.f32 %v840, %v942
      %v1007 = vmul.f32 %v842, %v943
      %v1008 = vmul.f32 %v846, %v944
      %v1009 = vmul.f32 %v848, %v945
      %v1010 = vmul.f32 %v850, %v946
      %v1011 = vmul.f32 %v852, %v947
      %v1012 = vmul.f32 %v856, %v948
      %v1013 = vmul.f32 %v858, %v949
      %v1014 = vmul.f32 %v860, %v950
      %v1015 = vmul.f32 %v862, %v951
      %v1016 = vmul.f32 %v866, %v952
      %v1017 = vmul.f32 %v868, %v953
      %v1018 = vmul.f32 %v870, %v954
      %v1019 = vmul.f32 %v872, %v955
      %v1020 = vmul.f32 %v876, %v956
      %v1021 = vmul.f32 %v878, %v957
      %v1022 = vmul.f32 %v880, %v958
      %v1023 = vmul.f32 %v882, %v959
      %v1024 = vmul.f32 %v886, %v960
      %v1025 = vmul.f32 %v888, %v961
      %v1026 = vmul.f32 %v890, %v962
      %v1027 = vmul.f32 %v892, %v963
      %v1028 = vmul.f32 %v896, %v964
      %v1029 = vmul.f32 %v898, %v965
      %v1030 = vmul.f32 %v900, %v966
      %v1031 = vmul.f32 %v902, %v967
      %v1032 = vmul.f32 %v968, 0.044715
      %v1033 = vmul.f32 %v969, 0.044715
      %v1034 = vmul.f32 %v970, 0.044715
      %v1035 = vmul.f32 %v971, 0.044715
      %v1036 = vmul.f32 %v972, 0.044715
      %v1037 = vmul.f32 %v973, 0.044715
      %v1038 = vmul.f32 %v974, 0.044715
      %v1039 = vmul.f32 %v975, 0.044715
      %v1040 = vmul.f32 %v976, 0.044715
      %v1041 = vmul.f32 %v977, 0.044715
      %v1042 = vmul.f32 %v978, 0.044715
      %v1043 = vmul.f32 %v979, 0.044715
      %v1044 = vmul.f32 %v980, 0.044715
      %v1045 = vmul.f32 %v981, 0.044715
      %v1046 = vmul.f32 %v982, 0.044715
      %v1047 = vmul.f32 %v983, 0.044715
      %v1048 = vmul.f32 %v984, 0.044715
      %v1049 = vmul.f32 %v985, 0.044715
      %v1050 = vmul.f32 %v986, 0.044715
      %v1051 = vmul.f32 %v987, 0.044715
      %v1052 = vmul.f32 %v988, 0.044715
      %v1053 = vmul.f32 %v989, 0.044715
      %v1054 = vmul.f32 %v990, 0.044715
      %v1055 = vmul.f32 %v991, 0.044715
      %v1056 = vmul.f32 %v992, 0.044715
      %v1057 = vmul.f32 %v993, 0.044715
      %v1058 = vmul.f32 %v994, 0.044715
      %v1059 = vmul.f32 %v995, 0.044715
      %v1060 = vmul.f32 %v996, 0.044715
      %v1061 = vmul.f32 %v997, 0.044715
      %v1062 = vmul.f32 %v998, 0.044715
      %v1063 = vmul.f32 %v999, 0.044715
      %v1064 = vmul.f32 %v1000, 0.044715
      %v1065 = vmul.f32 %v1001, 0.044715
      %v1066 = vmul.f32 %v1002, 0.044715
      %v1067 = vmul.f32 %v1003, 0.044715
      %v1068 = vmul.f32 %v1004, 0.044715
      %v1069 = vmul.f32 %v1005, 0.044715
      %v1070 = vmul.f32 %v1006, 0.044715
      %v1071 = vmul.f32 %v1007, 0.044715
      %v1072 = vmul.f32 %v1008, 0.044715
      %v1073 = vmul.f32 %v1009, 0.044715
      %v1074 = vmul.f32 %v1010, 0.044715
      %v1075 = vmul.f32 %v1011, 0.044715
      %v1076 = vmul.f32 %v1012, 0.044715
      %v1077 = vmul.f32 %v1013, 0.044715
      %v1078 = vmul.f32 %v1014, 0.044715
      %v1079 = vmul.f32 %v1015, 0.044715
      %v1080 = vmul.f32 %v1016, 0.044715
      %v1081 = vmul.f32 %v1017, 0.044715
      %v1082 = vmul.f32 %v1018, 0.044715
      %v1083 = vmul.f32 %v1019, 0.044715
      %v1084 = vmul.f32 %v1020, 0.044715
      %v1085 = vmul.f32 %v1021, 0.044715
      %v1086 = vmul.f32 %v1022, 0.044715
      %v1087 = vmul.f32 %v1023, 0.044715
      %v1088 = vmul.f32 %v1024, 0.044715
      %v1089 = vmul.f32 %v1025, 0.044715
      %v1090 = vmul.f32 %v1026, 0.044715
      %v1091 = vmul.f32 %v1027, 0.044715
      %v1092 = vmul.f32 %v1028, 0.044715
      %v1093 = vmul.f32 %v1029, 0.044715
      %v1094 = vmul.f32 %v1030, 0.044715
      %v1095 = vmul.f32 %v1031, 0.044715
      %v1096 = vadd.f32 %v746, %v1032
      %v1097 = vadd.f32 %v748, %v1033
      %v1098 = vadd.f32 %v750, %v1034
      %v1099 = vadd.f32 %v752, %v1035
      %v1100 = vadd.f32 %v756, %v1036
      %v1101 = vadd.f32 %v758, %v1037
      %v1102 = vadd.f32 %v760, %v1038
      %v1103 = vadd.f32 %v762, %v1039
      %v1104 = vadd.f32 %v766, %v1040
      %v1105 = vadd.f32 %v768, %v1041
      %v1106 = vadd.f32 %v770, %v1042
      %v1107 = vadd.f32 %v772, %v1043
      %v1108 = vadd.f32 %v776, %v1044
      %v1109 = vadd.f32 %v778, %v1045
      %v1110 = vadd.f32 %v780, %v1046
      %v1111 = vadd.f32 %v782, %v1047
      %v1112 = vadd.f32 %v786, %v1048
      %v1113 = vadd.f32 %v788, %v1049
      %v1114 = vadd.f32 %v790, %v1050
      %v1115 = vadd.f32 %v792, %v1051
      %v1116 = vadd.f32 %v796, %v1052
      %v1117 = vadd.f32 %v798, %v1053
      %v1118 = vadd.f32 %v800, %v1054
      %v1119 = vadd.f32 %v802, %v1055
      %v1120 = vadd.f32 %v806, %v1056
      %v1121 = vadd.f32 %v808, %v1057
      %v1122 = vadd.f32 %v810, %v1058
      %v1123 = vadd.f32 %v812, %v1059
      %v1124 = vadd.f32 %v816, %v1060
      %v1125 = vadd.f32 %v818, %v1061
      %v1126 = vadd.f32 %v820, %v1062
      %v1127 = vadd.f32 %v822, %v1063
      %v1128 = vadd.f32 %v826, %v1064
      %v1129 = vadd.f32 %v828, %v1065
      %v1130 = vadd.f32 %v830, %v1066
      %v1131 = vadd.f32 %v832, %v1067
      %v1132 = vadd.f32 %v836, %v1068
      %v1133 = vadd.f32 %v838, %v1069
      %v1134 = vadd.f32 %v840, %v1070
      %v1135 = vadd.f32 %v842, %v1071
      %v1136 = vadd.f32 %v846, %v1072
      %v1137 = vadd.f32 %v848, %v1073
      %v1138 = vadd.f32 %v850, %v1074
      %v1139 = vadd.f32 %v852, %v1075
      %v1140 = vadd.f32 %v856, %v1076
      %v1141 = vadd.f32 %v858, %v1077
      %v1142 = vadd.f32 %v860, %v1078
      %v1143 = vadd.f32 %v862, %v1079
      %v1144 = vadd.f32 %v866, %v1080
      %v1145 = vadd.f32 %v868, %v1081
      %v1146 = vadd.f32 %v870, %v1082
      %v1147 = vadd.f32 %v872, %v1083
      %v1148 = vadd.f32 %v876, %v1084
      %v1149 = vadd.f32 %v878, %v1085
      %v1150 = vadd.f32 %v880, %v1086
      %v1151 = vadd.f32 %v882, %v1087
      %v1152 = vadd.f32 %v886, %v1088
      %v1153 = vadd.f32 %v888, %v1089
      %v1154 = vadd.f32 %v890, %v1090
      %v1155 = vadd.f32 %v892, %v1091
      %v1156 = vadd.f32 %v896, %v1092
      %v1157 = vadd.f32 %v898, %v1093
      %v1158 = vadd.f32 %v900, %v1094
      %v1159 = vadd.f32 %v902, %v1095
      %v1160 = vmul.f32 %v1096, 0.7978846
      %v1161 = vmul.f32 %v1097, 0.7978846
      %v1162 = vmul.f32 %v1098, 0.7978846
      %v1163 = vmul.f32 %v1099, 0.7978846
      %v1164 = vmul.f32 %v1100, 0.7978846
      %v1165 = vmul.f32 %v1101, 0.7978846
      %v1166 = vmul.f32 %v1102, 0.7978846
      %v1167 = vmul.f32 %v1103, 0.7978846
      %v1168 = vmul.f32 %v1104, 0.7978846
      %v1169 = vmul.f32 %v1105, 0.7978846
      %v1170 = vmul.f32 %v1106, 0.7978846
      %v1171 = vmul.f32 %v1107, 0.7978846
      %v1172 = vmul.f32 %v1108, 0.7978846
      %v1173 = vmul.f32 %v1109, 0.7978846
      %v1174 = vmul.f32 %v1110, 0.7978846
      %v1175 = vmul.f32 %v1111, 0.7978846
      %v1176 = vmul.f32 %v1112, 0.7978846
      %v1177 = vmul.f32 %v1113, 0.7978846
      %v1178 = vmul.f32 %v1114, 0.7978846
      %v1179 = vmul.f32 %v1115, 0.7978846
      %v1180 = vmul.f32 %v1116, 0.7978846
      %v1181 = vmul.f32 %v1117, 0.7978846
      %v1182 = vmul.f32 %v1118, 0.7978846
      %v1183 = vmul.f32 %v1119, 0.7978846
      %v1184 = vmul.f32 %v1120, 0.7978846
      %v1185 = vmul.f32 %v1121, 0.7978846
      %v1186 = vmul.f32 %v1122, 0.7978846
      %v1187 = vmul.f32 %v1123, 0.7978846
      %v1188 = vmul.f32 %v1124, 0.7978846
      %v1189 = vmul.f32 %v1125, 0.7978846
      %v1190 = vmul.f32 %v1126, 0.7978846
      %v1191 = vmul.f32 %v1127, 0.7978846
      %v1192 = vmul.f32 %v1128, 0.7978846
      %v1193 = vmul.f32 %v1129, 0.7978846
      %v1194 = vmul.f32 %v1130, 0.7978846
      %v1195 = vmul.f32 %v1131, 0.7978846
      %v1196 = vmul.f32 %v1132, 0.7978846
      %v1197 = vmul.f32 %v1133, 0.7978846
      %v1198 = vmul.f32 %v1134, 0.7978846
      %v1199 = vmul.f32 %v1135, 0.7978846
      %v1200 = vmul.f32 %v1136, 0.7978846
      %v1201 = vmul.f32 %v1137, 0.7978846
      %v1202 = vmul.f32 %v1138, 0.7978846
      %v1203 = vmul.f32 %v1139, 0.7978846
      %v1204 = vmul.f32 %v1140, 0.7978846
      %v1205 = vmul.f32 %v1141, 0.7978846
      %v1206 = vmul.f32 %v1142, 0.7978846
      %v1207 = vmul.f32 %v1143, 0.7978846
      %v1208 = vmul.f32 %v1144, 0.7978846
      %v1209 = vmul.f32 %v1145, 0.7978846
      %v1210 = vmul.f32 %v1146, 0.7978846
      %v1211 = vmul.f32 %v1147, 0.7978846
      %v1212 = vmul.f32 %v1148, 0.7978846
      %v1213 = vmul.f32 %v1149, 0.7978846
      %v1214 = vmul.f32 %v1150, 0.7978846
      %v1215 = vmul.f32 %v1151, 0.7978846
      %v1216 = vmul.f32 %v1152, 0.7978846
      %v1217 = vmul.f32 %v1153, 0.7978846
      %v1218 = vmul.f32 %v1154, 0.7978846
      %v1219 = vmul.f32 %v1155, 0.7978846
      %v1220 = vmul.f32 %v1156, 0.7978846
      %v1221 = vmul.f32 %v1157, 0.7978846
      %v1222 = vmul.f32 %v1158, 0.7978846
      %v1223 = vmul.f32 %v1159, 0.7978846
      %v1224 = vtanh.pop %v1160
      %v1225 = vtanh.pop %v1161
      %v1226 = vtanh.pop %v1162
      %v1227 = vtanh.pop %v1163
      %v1228 = vtanh.pop %v1164
      %v1229 = vtanh.pop %v1165
      %v1230 = vtanh.pop %v1166
      %v1231 = vtanh.pop %v1167
      %v1232 = vtanh.pop %v1168
      %v1233 = vtanh.pop %v1169
      %v1234 = vtanh.pop %v1170
      %v1235 = vtanh.pop %v1171
      %v1236 = vtanh.pop %v1172
      %v1237 = vtanh.pop %v1173
      %v1238 = vtanh.pop %v1174
      %v1239 = vtanh.pop %v1175
      %v1240 = vtanh.pop %v1176
      %v1241 = vtanh.pop %v1177
      %v1242 = vtanh.pop %v1178
      %v1243 = vtanh.pop %v1179
      %v1244 = vtanh.pop %v1180
      %v1245 = vtanh.pop %v1181
      %v1246 = vtanh.pop %v1182
      %v1247 = vtanh.pop %v1183
      %v1248 = vtanh.pop %v1184
      %v1249 = vtanh.pop %v1185
      %v1250 = vtanh.pop %v1186
      %v1251 = vtanh.pop %v1187
      %v1252 = vtanh.pop %v1188
      %v1253 = vtanh.pop %v1189
      %v1254 = vtanh.pop %v1190
      %v1255 = vtanh.pop %v1191
      %v1256 = vtanh.pop %v1192
      %v1257 = vtanh.pop %v1193
      %v1258 = vtanh.pop %v1194
      %v1259 = vtanh.pop %v1195
      %v1260 = vtanh.pop %v1196
      %v1261 = vtanh.pop %v1197
      %v1262 = vtanh.pop %v1198
      %v1263 = vtanh.pop %v1199
      %v1264 = vtanh.pop %v1200
      %v1265 = vtanh.pop %v1201
      %v1266 = vtanh.pop %v1202
      %v1267 = vtanh.pop %v1203
      %v1268 = vtanh.pop %v1204
      %v1269 = vtanh.pop %v1205
      %v1270 = vtanh.pop %v1206
      %v1271 = vtanh.pop %v1207
      %v1272 = vtanh.pop %v1208
      %v1273 = vtanh.pop %v1209
      %v1274 = vtanh.pop %v1210
      %v1275 = vtanh.pop %v1211
      %v1276 = vtanh.pop %v1212
      %v1277 = vtanh.pop %v1213
      %v1278 = vtanh.pop %v1214
      %v1279 = vtanh.pop %v1215
      %v1280 = vtanh.pop %v1216
      %v1281 = vtanh.pop %v1217
      %v1282 = vtanh.pop %v1218
      %v1283 = vtanh.pop %v1219
      %v1284 = vtanh.pop %v1220
      %v1285 = vtanh.pop %v1221
      %v1286 = vtanh.pop %v1222
      %v1287 = vtanh.pop %v1223
      %v1288 = vadd.f32 %v1224, 1.0
      %v1289 = vadd.f32 %v1225, 1.0
      %v1290 = vadd.f32 %v1226, 1.0
      %v1291 = vadd.f32 %v1227, 1.0
      %v1292 = vadd.f32 %v1228, 1.0
      %v1293 = vadd.f32 %v1229, 1.0
      %v1294 = vadd.f32 %v1230, 1.0
      %v1295 = vadd.f32 %v1231, 1.0
      %v1296 = vadd.f32 %v1232, 1.0
      %v1297 = vadd.f32 %v1233, 1.0
      %v1298 = vadd.f32 %v1234, 1.0
      %v1299 = vadd.f32 %v1235, 1.0
      %v1300 = vadd.f32 %v1236, 1.0
      %v1301 = vadd.f32 %v1237, 1.0
      %v1302 = vadd.f32 %v1238, 1.0
      %v1303 = vadd.f32 %v1239, 1.0
      %v1304 = vadd.f32 %v1240, 1.0
      %v1305 = vadd.f32 %v1241, 1.0
      %v1306 = vadd.f32 %v1242, 1.0
      %v1307 = vadd.f32 %v1243, 1.0
      %v1308 = vadd.f32 %v1244, 1.0
      %v1309 = vadd.f32 %v1245, 1.0
      %v1310 = vadd.f32 %v1246, 1.0
      %v1311 = vadd.f32 %v1247, 1.0
      %v1312 = vadd.f32 %v1248, 1.0
      %v1313 = vadd.f32 %v1249, 1.0
      %v1314 = vadd.f32 %v1250, 1.0
      %v1315 = vadd.f32 %v1251, 1.0
      %v1316 = vadd.f32 %v1252, 1.0
      %v1317 = vadd.f32 %v1253, 1.0
      %v1318 = vadd.f32 %v1254, 1.0
      %v1319 = vadd.f32 %v1255, 1.0
      %v1320 = vadd.f32 %v1256, 1.0
      %v1321 = vadd.f32 %v1257, 1.0
      %v1322 = vadd.f32 %v1258, 1.0
      %v1323 = vadd.f32 %v1259, 1.0
      %v1324 = vadd.f32 %v1260, 1.0
      %v1325 = vadd.f32 %v1261, 1.0
      %v1326 = vadd.f32 %v1262, 1.0
      %v1327 = vadd.f32 %v1263, 1.0
      %v1328 = vadd.f32 %v1264, 1.0
      %v1329 = vadd.f32 %v1265, 1.0
      %v1330 = vadd.f32 %v1266, 1.0
      %v1331 = vadd.f32 %v1267, 1.0
      %v1332 = vadd.f32 %v1268, 1.0
      %v1333 = vadd.f32 %v1269, 1.0
      %v1334 = vadd.f32 %v1270, 1.0
      %v1335 = vadd.f32 %v1271, 1.0
      %v1336 = vadd.f32 %v1272, 1.0
      %v1337 = vadd.f32 %v1273, 1.0
      %v1338 = vadd.f32 %v1274, 1.0
      %v1339 = vadd.f32 %v1275, 1.0
      %v1340 = vadd.f32 %v1276, 1.0
      %v1341 = vadd.f32 %v1277, 1.0
      %v1342 = vadd.f32 %v1278, 1.0
      %v1343 = vadd.f32 %v1279, 1.0
      %v1344 = vadd.f32 %v1280, 1.0
      %v1345 = vadd.f32 %v1281, 1.0
      %v1346 = vadd.f32 %v1282, 1.0
      %v1347 = vadd.f32 %v1283, 1.0
      %v1348 = vadd.f32 %v1284, 1.0
      %v1349 = vadd.f32 %v1285, 1.0
      %v1350 = vadd.f32 %v1286, 1.0
      %v1351 = vadd.f32 %v1287, 1.0
      %v1352 = vmul.f32 %v1288, 0.5
      %v1353 = vmul.f32 %v1289, 0.5
      %v1354 = vmul.f32 %v1290, 0.5
      %v1355 = vmul.f32 %v1291, 0.5
      %v1356 = vmul.f32 %v1292, 0.5
      %v1357 = vmul.f32 %v1293, 0.5
      %v1358 = vmul.f32 %v1294, 0.5
      %v1359 = vmul.f32 %v1295, 0.5
      %v1360 = vmul.f32 %v1296, 0.5
      %v1361 = vmul.f32 %v1297, 0.5
      %v1362 = vmul.f32 %v1298, 0.5
      %v1363 = vmul.f32 %v1299, 0.5
      %v1364 = vmul.f32 %v1300, 0.5
      %v1365 = vmul.f32 %v1301, 0.5
      %v1366 = vmul.f32 %v1302, 0.5
      %v1367 = vmul.f32 %v1303, 0.5
      %v1368 = vmul.f32 %v1304, 0.5
      %v1369 = vmul.f32 %v1305, 0.5
      %v1370 = vmul.f32 %v1306, 0.5
      %v1371 = vmul.f32 %v1307, 0.5
      %v1372 = vmul.f32 %v1308, 0.5
      %v1373 = vmul.f32 %v1309, 0.5
      %v1374 = vmul.f32 %v1310, 0.5
      %v1375 = vmul.f32 %v1311, 0.5
      %v1376 = vmul.f32 %v1312, 0.5
      %v1377 = vmul.f32 %v1313, 0.5
      %v1378 = vmul.f32 %v1314, 0.5
      %v1379 = vmul.f32 %v1315, 0.5
      %v1380 = vmul.f32 %v1316, 0.5
      %v1381 = vmul.f32 %v1317, 0.5
      %v1382 = vmul.f32 %v1318, 0.5
      %v1383 = vmul.f32 %v1319, 0.5
      %v1384 = vmul.f32 %v1320, 0.5
      %v1385 = vmul.f32 %v1321, 0.5
      %v1386 = vmul.f32 %v1322, 0.5
      %v1387 = vmul.f32 %v1323, 0.5
      %v1388 = vmul.f32 %v1324, 0.5
      %v1389 = vmul.f32 %v1325, 0.5
      %v1390 = vmul.f32 %v1326, 0.5
      %v1391 = vmul.f32 %v1327, 0.5
      %v1392 = vmul.f32 %v1328, 0.5
      %v1393 = vmul.f32 %v1329, 0.5
      %v1394 = vmul.f32 %v1330, 0.5
      %v1395 = vmul.f32 %v1331, 0.5
      %v1396 = vmul.f32 %v1332, 0.5
      %v1397 = vmul.f32 %v1333, 0.5
      %v1398 = vmul.f32 %v1334, 0.5
      %v1399 = vmul.f32 %v1335, 0.5
      %v1400 = vmul.f32 %v1336, 0.5
      %v1401 = vmul.f32 %v1337, 0.5
      %v1402 = vmul.f32 %v1338, 0.5
      %v1403 = vmul.f32 %v1339, 0.5
      %v1404 = vmul.f32 %v1340, 0.5
      %v1405 = vmul.f32 %v1341, 0.5
      %v1406 = vmul.f32 %v1342, 0.5
      %v1407 = vmul.f32 %v1343, 0.5
      %v1408 = vmul.f32 %v1344, 0.5
      %v1409 = vmul.f32 %v1345, 0.5
      %v1410 = vmul.f32 %v1346, 0.5
      %v1411 = vmul.f32 %v1347, 0.5
      %v1412 = vmul.f32 %v1348, 0.5
      %v1413 = vmul.f32 %v1349, 0.5
      %v1414 = vmul.f32 %v1350, 0.5
      %v1415 = vmul.f32 %v1351, 0.5
      %v1416 = vmul.f32 %v746, %v1352
      %v1417 = vmul.f32 %v748, %v1353
      %v1418 = vmul.f32 %v750, %v1354
      %v1419 = vmul.f32 %v752, %v1355
      %v1420 = vmul.f32 %v756, %v1356
      %v1421 = vmul.f32 %v758, %v1357
      %v1422 = vmul.f32 %v760, %v1358
      %v1423 = vmul.f32 %v762, %v1359
      %v1424 = vmul.f32 %v766, %v1360
      %v1425 = vmul.f32 %v768, %v1361
      %v1426 = vmul.f32 %v770, %v1362
      %v1427 = vmul.f32 %v772, %v1363
      %v1428 = vmul.f32 %v776, %v1364
      %v1429 = vmul.f32 %v778, %v1365
      %v1430 = vmul.f32 %v780, %v1366
      %v1431 = vmul.f32 %v782, %v1367
      %v1432 = vmul.f32 %v786, %v1368
      %v1433 = vmul.f32 %v788, %v1369
      %v1434 = vmul.f32 %v790, %v1370
      %v1435 = vmul.f32 %v792, %v1371
      %v1436 = vmul.f32 %v796, %v1372
      %v1437 = vmul.f32 %v798, %v1373
      %v1438 = vmul.f32 %v800, %v1374
      %v1439 = vmul.f32 %v802, %v1375
      %v1440 = vmul.f32 %v806, %v1376
      %v1441 = vmul.f32 %v808, %v1377
      %v1442 = vmul.f32 %v810, %v1378
      %v1443 = vmul.f32 %v812, %v1379
      %v1444 = vmul.f32 %v816, %v1380
      %v1445 = vmul.f32 %v818, %v1381
      %v1446 = vmul.f32 %v820, %v1382
      %v1447 = vmul.f32 %v822, %v1383
      %v1448 = vmul.f32 %v826, %v1384
      %v1449 = vmul.f32 %v828, %v1385
      %v1450 = vmul.f32 %v830, %v1386
      %v1451 = vmul.f32 %v832, %v1387
      %v1452 = vmul.f32 %v836, %v1388
      %v1453 = vmul.f32 %v838, %v1389
      %v1454 = vmul.f32 %v840, %v1390
      %v1455 = vmul.f32 %v842, %v1391
      %v1456 = vmul.f32 %v846, %v1392
      %v1457 = vmul.f32 %v848, %v1393
      %v1458 = vmul.f32 %v850, %v1394
      %v1459 = vmul.f32 %v852, %v1395
      %v1460 = vmul.f32 %v856, %v1396
      %v1461 = vmul.f32 %v858, %v1397
      %v1462 = vmul.f32 %v860, %v1398
      %v1463 = vmul.f32 %v862, %v1399
      %v1464 = vmul.f32 %v866, %v1400
      %v1465 = vmul.f32 %v868, %v1401
      %v1466 = vmul.f32 %v870, %v1402
      %v1467 = vmul.f32 %v872, %v1403
      %v1468 = vmul.f32 %v876, %v1404
      %v1469 = vmul.f32 %v878, %v1405
      %v1470 = vmul.f32 %v880, %v1406
      %v1471 = vmul.f32 %v882, %v1407
      %v1472 = vmul.f32 %v886, %v1408
      %v1473 = vmul.f32 %v888, %v1409
      %v1474 = vmul.f32 %v890, %v1410
      %v1475 = vmul.f32 %v892, %v1411
      %v1476 = vmul.f32 %v896, %v1412
      %v1477 = vmul.f32 %v898, %v1413
      %v1478 = vmul.f32 %v900, %v1414
      %v1479 = vmul.f32 %v902, %v1415
      %v1480 = vadd.f32 %v1416, %v1417
      %v1481 = vadd.f32 %v1480, %v1418
      %v1482 = vadd.f32 %v1481, %v1419
      %v1483 = vadd.f32 %v1482, %v1420
      %v1484 = vadd.f32 %v1483, %v1421
      %v1485 = vadd.f32 %v1484, %v1422
      %v1486 = vadd.f32 %v1485, %v1423
      %v1487 = vadd.f32 %v1486, %v1424
      %v1488 = vadd.f32 %v1487, %v1425
      %v1489 = vadd.f32 %v1488, %v1426
      %v1490 = vadd.f32 %v1489, %v1427
      %v1491 = vadd.f32 %v1490, %v1428
      %v1492 = vadd.f32 %v1491, %v1429
      %v1493 = vadd.f32 %v1492, %v1430
      %v1494 = vadd.f32 %v1493, %v1431
      %v1495 = vadd.f32 %v1494, %v1432
      %v1496 = vadd.f32 %v1495, %v1433
      %v1497 = vadd.f32 %v1496, %v1434
      %v1498 = vadd.f32 %v1497, %v1435
      %v1499 = vadd.f32 %v1498, %v1436
      %v1500 = vadd.f32 %v1499, %v1437
      %v1501 = vadd.f32 %v1500, %v1438
      %v1502 = vadd.f32 %v1501, %v1439
      %v1503 = vadd.f32 %v1502, %v1440
      %v1504 = vadd.f32 %v1503, %v1441
      %v1505 = vadd.f32 %v1504, %v1442
      %v1506 = vadd.f32 %v1505, %v1443
      %v1507 = vadd.f32 %v1506, %v1444
      %v1508 = vadd.f32 %v1507, %v1445
      %v1509 = vadd.f32 %v1508, %v1446
      %v1510 = vadd.f32 %v1509, %v1447
      %v1511 = vadd.f32 %v1510, %v1448
      %v1512 = vadd.f32 %v1511, %v1449
      %v1513 = vadd.f32 %v1512, %v1450
      %v1514 = vadd.f32 %v1513, %v1451
      %v1515 = vadd.f32 %v1514, %v1452
      %v1516 = vadd.f32 %v1515, %v1453
      %v1517 = vadd.f32 %v1516, %v1454
      %v1518 = vadd.f32 %v1517, %v1455
      %v1519 = vadd.f32 %v1518, %v1456
      %v1520 = vadd.f32 %v1519, %v1457
      %v1521 = vadd.f32 %v1520, %v1458
      %v1522 = vadd.f32 %v1521, %v1459
      %v1523 = vadd.f32 %v1522, %v1460
      %v1524 = vadd.f32 %v1523, %v1461
      %v1525 = vadd.f32 %v1524, %v1462
      %v1526 = vadd.f32 %v1525, %v1463
      %v1527 = vadd.f32 %v1526, %v1464
      %v1528 = vadd.f32 %v1527, %v1465
      %v1529 = vadd.f32 %v1528, %v1466
      %v1530 = vadd.f32 %v1529, %v1467
      %v1531 = vadd.f32 %v1530, %v1468
      %v1532 = vadd.f32 %v1531, %v1469
      %v1533 = vadd.f32 %v1532, %v1470
      %v1534 = vadd.f32 %v1533, %v1471
      %v1535 = vadd.f32 %v1534, %v1472
      %v1536 = vadd.f32 %v1535, %v1473
      %v1537 = vadd.f32 %v1536, %v1474
      %v1538 = vadd.f32 %v1537, %v1475
      %v1539 = vadd.f32 %v1538, %v1476
      %v1540 = vadd.f32 %v1539, %v1477
      %v1541 = vadd.f32 %v1540, %v1478
      %v1542 = vadd.f32 %v1541, %v1479
      %1543 = vadd.xlane.f32.xlu0 %v1542
      %v1544 = vpop.xlane.xlu0 %1543
      %v1545 = vrot.slane %v1544, 4
      %v1546 = vadd.f32 %v1544, %v1545
      %v1547 = vrot.slane %v1546, 2
      %v1548 = vadd.f32 %v1546, %v1547
      %v1549 = vrot.slane %v1548, 1
      %v1550 = vadd.f32 %v1548, %v1549
      %s1551 = vtos %v1550
      %s1552 = smul.f32 %s1551, 1.5258789e-05
      %v1553 = vmul.f32 %v1416, %v1416
      %v1554 = vmul.f32 %v1417, %v1417
      %v1555 = vmul.f32 %v1418, %v1418
      %v1556 = vmul.f32 %v1419, %v1419
      %v1557 = vmul.f32 %v1420, %v1420
      %v1558 = vmul.f32 %v1421, %v1421
      %v1559 = vmul.f32 %v1422, %v1422
      %v1560 = vmul.f32 %v1423, %v1423
      %v1561 = vmul.f32 %v1424, %v1424
      %v1562 = vmul.f32 %v1425, %v1425
      %v1563 = vmul.f32 %v1426, %v1426
      %v1564 = vmul.f32 %v1427, %v1427
      %v1565 = vmul.f32 %v1428, %v1428
      %v1566 = vmul.f32 %v1429, %v1429
      %v1567 = vmul.f32 %v1430, %v1430
      %v1568 = vmul.f32 %v1431, %v1431
      %v1569 = vmul.f32 %v1432, %v1432
      %v1570 = vmul.f32 %v1433, %v1433
      %v1571 = vmul.f32 %v1434, %v1434
      %v1572 = vmul.f32 %v1435, %v1435
      %v1573 = vmul.f32 %v1436, %v1436
      %v1574 = vmul.f32 %v1437, %v1437
      %v1575 = vmul.f32 %v1438, %v1438
      %v1576 = vmul.f32 %v1439, %v1439
      %v1577 = vmul.f32 %v1440, %v1440
      %v1578 = vmul.f32 %v1441, %v1441
      %v1579 = vmul.f32 %v1442, %v1442
      %v1580 = vmul.f32 %v1443, %v1443
      %v1581 = vmul.f32 %v1444, %v1444
      %v1582 = vmul.f32 %v1445, %v1445
      %v1583 = vmul.f32 %v1446, %v1446
      %v1584 = vmul.f32 %v1447, %v1447
      %v1585 = vmul.f32 %v1448, %v1448
      %v1586 = vmul.f32 %v1449, %v1449
      %v1587 = vmul.f32 %v1450, %v1450
      %v1588 = vmul.f32 %v1451, %v1451
      %v1589 = vmul.f32 %v1452, %v1452
      %v1590 = vmul.f32 %v1453, %v1453
      %v1591 = vmul.f32 %v1454, %v1454
      %v1592 = vmul.f32 %v1455, %v1455
      %v1593 = vmul.f32 %v1456, %v1456
      %v1594 = vmul.f32 %v1457, %v1457
      %v1595 = vmul.f32 %v1458, %v1458
      %v1596 = vmul.f32 %v1459, %v1459
      %v1597 = vmul.f32 %v1460, %v1460
      %v1598 = vmul.f32 %v1461, %v1461
      %v1599 = vmul.f32 %v1462, %v1462
      %v1600 = vmul.f32 %v1463, %v1463
      %v1601 = vmul.f32 %v1464, %v1464
      %v1602 = vmul.f32 %v1465, %v1465
      %v1603 = vmul.f32 %v1466, %v1466
      %v1604 = vmul.f32 %v1467, %v1467
      %v1605 = vmul.f32 %v1468, %v1468
      %v1606 = vmul.f32 %v1469, %v1469
      %v1607 = vmul.f32 %v1470, %v1470
      %v1608 = vmul.f32 %v1471, %v1471
      %v1609 = vmul.f32 %v1472, %v1472
      %v1610 = vmul.f32 %v1473, %v1473
      %v1611 = vmul.f32 %v1474, %v1474
      %v1612 = vmul.f32 %v1475, %v1475
      %v1613 = vmul.f32 %v1476, %v1476
      %v1614 = vmul.f32 %v1477, %v1477
      %v1615 = vmul.f32 %v1478, %v1478
      %v1616 = vmul.f32 %v1479, %v1479
      %v1617 = vadd.f32 %v1553, %v1554
      %v1618 = vadd.f32 %v1617, %v1555
      %v1619 = vadd.f32 %v1618, %v1556
      %v1620 = vadd.f32 %v1619, %v1557
      %v1621 = vadd.f32 %v1620, %v1558
      %v1622 = vadd.f32 %v1621, %v1559
      %v1623 = vadd.f32 %v1622, %v1560
      %v1624 = vadd.f32 %v1623, %v1561
      %v1625 = vadd.f32 %v1624, %v1562
      %v1626 = vadd.f32 %v1625, %v1563
      %v1627 = vadd.f32 %v1626, %v1564
      %v1628 = vadd.f32 %v1627, %v1565
      %v1629 = vadd.f32 %v1628, %v1566
      %v1630 = vadd.f32 %v1629, %v1567
      %v1631 = vadd.f32 %v1630, %v1568
      %v1632 = vadd.f32 %v1631, %v1569
      %v1633 = vadd.f32 %v1632, %v1570
      %v1634 = vadd.f32 %v1633, %v1571
      %v1635 = vadd.f32 %v1634, %v1572
      %v1636 = vadd.f32 %v1635, %v1573
      %v1637 = vadd.f32 %v1636, %v1574
      %v1638 = vadd.f32 %v1637, %v1575
      %v1639 = vadd.f32 %v1638, %v1576
      %v1640 = vadd.f32 %v1639, %v1577
      %v1641 = vadd.f32 %v1640, %v1578
      %v1642 = vadd.f32 %v1641, %v1579
      %v1643 = vadd.f32 %v1642, %v1580
      %v1644 = vadd.f32 %v1643, %v1581
      %v1645 = vadd.f32 %v1644, %v1582
      %v1646 = vadd.f32 %v1645, %v1583
      %v1647 = vadd.f32 %v1646, %v1584
      %v1648 = vadd.f32 %v1647, %v1585
      %v1649 = vadd.f32 %v1648, %v1586
      %v1650 = vadd.f32 %v1649, %v1587
      %v1651 = vadd.f32 %v1650, %v1588
      %v1652 = vadd.f32 %v1651, %v1589
      %v1653 = vadd.f32 %v1652, %v1590
      %v1654 = vadd.f32 %v1653, %v1591
      %v1655 = vadd.f32 %v1654, %v1592
      %v1656 = vadd.f32 %v1655, %v1593
      %v1657 = vadd.f32 %v1656, %v1594
      %v1658 = vadd.f32 %v1657, %v1595
      %v1659 = vadd.f32 %v1658, %v1596
      %v1660 = vadd.f32 %v1659, %v1597
      %v1661 = vadd.f32 %v1660, %v1598
      %v1662 = vadd.f32 %v1661, %v1599
      %v1663 = vadd.f32 %v1662, %v1600
      %v1664 = vadd.f32 %v1663, %v1601
      %v1665 = vadd.f32 %v1664, %v1602
      %v1666 = vadd.f32 %v1665, %v1603
      %v1667 = vadd.f32 %v1666, %v1604
      %v1668 = vadd.f32 %v1667, %v1605
      %v1669 = vadd.f32 %v1668, %v1606
      %v1670 = vadd.f32 %v1669, %v1607
      %v1671 = vadd.f32 %v1670, %v1608
      %v1672 = vadd.f32 %v1671, %v1609
      %v1673 = vadd.f32 %v1672, %v1610
      %v1674 = vadd.f32 %v1673, %v1611
      %v1675 = vadd.f32 %v1674, %v1612
      %v1676 = vadd.f32 %v1675, %v1613
      %v1677 = vadd.f32 %v1676, %v1614
      %v1678 = vadd.f32 %v1677, %v1615
      %v1679 = vadd.f32 %v1678, %v1616
      %1680 = vadd.xlane.f32.xlu0 %v1679
      %v1681 = vpop.xlane.xlu0 %1680
      %v1682 = vrot.slane %v1681, 4
      %v1683 = vadd.f32 %v1681, %v1682
      %v1684 = vrot.slane %v1683, 2
      %v1685 = vadd.f32 %v1683, %v1684
      %v1686 = vrot.slane %v1685, 1
      %v1687 = vadd.f32 %v1685, %v1686
      %s1688 = vtos %v1687
      %s1689 = smul.f32 %s1688, 1.5258789e-05
      %s1690 = smul.f32 %s1552, %s1552
      %s1691 = ssub.f32 %s1689, %s1690
      %v1692 = vstv %s1552
      %v1693 = vsub.f32 %v1416, %v1692
      %v1694 = vsub.f32 %v1417, %v1692
      %v1695 = vsub.f32 %v1418, %v1692
      %v1696 = vsub.f32 %v1419, %v1692
      %v1697 = vsub.f32 %v1420, %v1692
      %v1698 = vsub.f32 %v1421, %v1692
      %v1699 = vsub.f32 %v1422, %v1692
      %v1700 = vsub.f32 %v1423, %v1692
      %v1701 = vsub.f32 %v1424, %v1692
      %v1702 = vsub.f32 %v1425, %v1692
      %v1703 = vsub.f32 %v1426, %v1692
      %v1704 = vsub.f32 %v1427, %v1692
      %v1705 = vsub.f32 %v1428, %v1692
      %v1706 = vsub.f32 %v1429, %v1692
      %v1707 = vsub.f32 %v1430, %v1692
      %v1708 = vsub.f32 %v1431, %v1692
      %v1709 = vsub.f32 %v1432, %v1692
      %v1710 = vsub.f32 %v1433, %v1692
      %v1711 = vsub.f32 %v1434, %v1692
      %v1712 = vsub.f32 %v1435, %v1692
      %v1713 = vsub.f32 %v1436, %v1692
      %v1714 = vsub.f32 %v1437, %v1692
      %v1715 = vsub.f32 %v1438, %v1692
      %v1716 = vsub.f32 %v1439, %v1692
      %v1717 = vsub.f32 %v1440, %v1692
      %v1718 = vsub.f32 %v1441, %v1692
      %v1719 = vsub.f32 %v1442, %v1692
      %v1720 = vsub.f32 %v1443, %v1692
      %v1721 = vsub.f32 %v1444, %v1692
      %v1722 = vsub.f32 %v1445, %v1692
      %v1723 = vsub.f32 %v1446, %v1692
      %v1724 = vsub.f32 %v1447, %v1692
      %v1725 = vsub.f32 %v1448, %v1692
      %v1726 = vsub.f32 %v1449, %v1692
      %v1727 = vsub.f32 %v1450, %v1692
      %v1728 = vsub.f32 %v1451, %v1692
      %v1729 = vsub.f32 %v1452, %v1692
      %v1730 = vsub.f32 %v1453, %v1692
      %v1731 = vsub.f32 %v1454, %v1692
      %v1732 = vsub.f32 %v1455, %v1692
      %v1733 = vsub.f32 %v1456, %v1692
      %v1734 = vsub.f32 %v1457, %v1692
      %v1735 = vsub.f32 %v1458, %v1692
      %v1736 = vsub.f32 %v1459, %v1692
      %v1737 = vsub.f32 %v1460, %v1692
      %v1738 = vsub.f32 %v1461, %v1692
      %v1739 = vsub.f32 %v1462, %v1692
      %v1740 = vsub.f32 %v1463, %v1692
      %v1741 = vsub.f32 %v1464, %v1692
      %v1742 = vsub.f32 %v1465, %v1692
      %v1743 = vsub.f32 %v1466, %v1692
      %v1744 = vsub.f32 %v1467, %v1692
      %v1745 = vsub.f32 %v1468, %v1692
      %v1746 = vsub.f32 %v1469, %v1692
      %v1747 = vsub.f32 %v1470, %v1692
      %v1748 = vsub.f32 %v1471, %v1692
      %v1749 = vsub.f32 %v1472, %v1692
      %v1750 = vsub.f32 %v1473, %v1692
      %v1751 = vsub.f32 %v1474, %v1692
      %v1752 = vsub.f32 %v1475, %v1692
      %v1753 = vsub.f32 %v1476, %v1692
      %v1754 = vsub.f32 %v1477, %v1692
      %v1755 = vsub.f32 %v1478, %v1692
      %v1756 = vsub.f32 %v1479, %v1692
      %s1757 = sadd.f32 %s1691, 1e-05
      %v1758 = vstv %s1757
      %v1759 = vrsqrt.pop %v1758
      %s1760 = vtos %v1759
      %v1761 = vstv %s1760
      %v1762 = vmul.f32 %v1693, %v1761
      %v1763 = vmul.f32 %v1694, %v1761
      %v1764 = vmul.f32 %v1695, %v1761
      %v1765 = vmul.f32 %v1696, %v1761
      %v1766 = vmul.f32 %v1697, %v1761
      %v1767 = vmul.f32 %v1698, %v1761
      %v1768 = vmul.f32 %v1699, %v1761
      %v1769 = vmul.f32 %v1700, %v1761
      %v1770 = vmul.f32 %v1701, %v1761
      %v1771 = vmul.f32 %v1702, %v1761
      %v1772 = vmul.f32 %v1703, %v1761
      %v1773 = vmul.f32 %v1704, %v1761
      %v1774 = vmul.f32 %v1705, %v1761
      %v1775 = vmul.f32 %v1706, %v1761
      %v1776 = vmul.f32 %v1707, %v1761
      %v1777 = vmul.f32 %v1708, %v1761
      %v1778 = vmul.f32 %v1709, %v1761
      %v1779 = vmul.f32 %v1710, %v1761
      %v1780 = vmul.f32 %v1711, %v1761
      %v1781 = vmul.f32 %v1712, %v1761
      %v1782 = vmul.f32 %v1713, %v1761
      %v1783 = vmul.f32 %v1714, %v1761
      %v1784 = vmul.f32 %v1715, %v1761
      %v1785 = vmul.f32 %v1716, %v1761
      %v1786 = vmul.f32 %v1717, %v1761
      %v1787 = vmul.f32 %v1718, %v1761
      %v1788 = vmul.f32 %v1719, %v1761
      %v1789 = vmul.f32 %v1720, %v1761
      %v1790 = vmul.f32 %v1721, %v1761
      %v1791 = vmul.f32 %v1722, %v1761
      %v1792 = vmul.f32 %v1723, %v1761
      %v1793 = vmul.f32 %v1724, %v1761
      %v1794 = vmul.f32 %v1725, %v1761
      %v1795 = vmul.f32 %v1726, %v1761
      %v1796 = vmul.f32 %v1727, %v1761
      %v1797 = vmul.f32 %v1728, %v1761
      %v1798 = vmul.f32 %v1729, %v1761
      %v1799 = vmul.f32 %v1730, %v1761
      %v1800 = vmul.f32 %v1731, %v1761
      %v1801 = vmul.f32 %v1732, %v1761
      %v1802 = vmul.f32 %v1733, %v1761
      %v1803 = vmul.f32 %v1734, %v1761
      %v1804 = vmul.f32 %v1735, %v1761
      %v1805 = vmul.f32 %v1736, %v1761
      %v1806 = vmul.f32 %v1737, %v1761
      %v1807 = vmul.f32 %v1738, %v1761
      %v1808 = vmul.f32 %v1739, %v1761
      %v1809 = vmul.f32 %v1740, %v1761
      %v1810 = vmul.f32 %v1741, %v1761
      %v1811 = vmul.f32 %v1742, %v1761
      %v1812 = vmul.f32 %v1743, %v1761
      %v1813 = vmul.f32 %v1744, %v1761
      %v1814 = vmul.f32 %v1745, %v1761
      %v1815 = vmul.f32 %v1746, %v1761
      %v1816 = vmul.f32 %v1747, %v1761
      %v1817 = vmul.f32 %v1748, %v1761
      %v1818 = vmul.f32 %v1749, %v1761
      %v1819 = vmul.f32 %v1750, %v1761
      %v1820 = vmul.f32 %v1751, %v1761
      %v1821 = vmul.f32 %v1752, %v1761
      %v1822 = vmul.f32 %v1753, %v1761
      %v1823 = vmul.f32 %v1754, %v1761
      %v1824 = vmul.f32 %v1755, %v1761
      %v1825 = vmul.f32 %v1756, %v1761
      %v1826 = vpack.c.bf16 %v1764, %v1762
      %v1827 = vpack.c.bf16 %v1765, %v1763
      %v1828 = vpack.c.bf16 %v1768, %v1766
      %v1829 = vpack.c.bf16 %v1769, %v1767
      %v1830 = vpack.c.bf16 %v1772, %v1770
      %v1831 = vpack.c.bf16 %v1773, %v1771
      %v1832 = vpack.c.bf16 %v1776, %v1774
      %v1833 = vpack.c.bf16 %v1777, %v1775
      %v1834 = vpack.c.bf16 %v1780, %v1778
      %v1835 = vpack.c.bf16 %v1781, %v1779
      %v1836 = vpack.c.bf16 %v1784, %v1782
      %v1837 = vpack.c.bf16 %v1785, %v1783
      %v1838 = vpack.c.bf16 %v1788, %v1786
      %v1839 = vpack.c.bf16 %v1789, %v1787
      %v1840 = vpack.c.bf16 %v1792, %v1790
      %v1841 = vpack.c.bf16 %v1793, %v1791
      %v1842 = vpack.c.bf16 %v1796, %v1794
      %v1843 = vpack.c.bf16 %v1797, %v1795
      %v1844 = vpack.c.bf16 %v1800, %v1798
      %v1845 = vpack.c.bf16 %v1801, %v1799
      %v1846 = vpack.c.bf16 %v1804, %v1802
      %v1847 = vpack.c.bf16 %v1805, %v1803
      %v1848 = vpack.c.bf16 %v1808, %v1806
      %v1849 = vpack.c.bf16 %v1809, %v1807
      %v1850 = vpack.c.bf16 %v1812, %v1810
      %v1851 = vpack.c.bf16 %v1813, %v1811
      %v1852 = vpack.c.bf16 %v1816, %v1814
      %v1853 = vpack.c.bf16 %v1817, %v1815
      %v1854 = vpack.c.bf16 %v1820, %v1818
      %v1855 = vpack.c.bf16 %v1821, %v1819
      %v1856 = vpack.c.bf16 %v1824, %v1822
      %v1857 = vpack.c.bf16 %v1825, %v1823
      %v1858 = vld [vmem:[%s3] sm:$0xff]
      %v1859 = vld [vmem:[%s3 + $0x8] sm:$0xff]
      %v1860 = vld [vmem:[%s3 + $0x10] sm:$0xff]
      %v1861 = vld [vmem:[%s3 + $0x18] sm:$0xff]
      %v1862 = vld [vmem:[%s3 + $0x20] sm:$0xff]
      %v1863 = vld [vmem:[%s3 + $0x28] sm:$0xff]
      %v1864 = vld [vmem:[%s3 + $0x30] sm:$0xff]
      %v1865 = vld [vmem:[%s3 + $0x38] sm:$0xff]
      %v1866 = vld [vmem:[%s4] sm:$0xff]
      %v1867 = vld [vmem:[%s4 + $0x8] sm:$0xff]
      %v1868 = vld [vmem:[%s4 + $0x10] sm:$0xff]
      %v1869 = vld [vmem:[%s4 + $0x18] sm:$0xff]
      %v1870 = vld [vmem:[%s4 + $0x20] sm:$0xff]
      %v1871 = vld [vmem:[%s4 + $0x28] sm:$0xff]
      %v1872 = vld [vmem:[%s4 + $0x30] sm:$0xff]
      %v1873 = vld [vmem:[%s4 + $0x38] sm:$0xff]
      %1875 = vset.pattern.permute.xlu0 0
      %1876 = vperm.xlu0 %1875, %v1866
      %v1877 = vpop.permute.xlu0 %1876
      %1880 = vset.pattern.permute.xlu0 0
      %1881 = vperm.xlu0 %1880, %v1867
      %v1882 = vpop.permute.xlu0 %1881
      %1885 = vset.pattern.permute.xlu0 0
      %1886 = vperm.xlu0 %1885, %v1868
      %v1887 = vpop.permute.xlu0 %1886
      %1890 = vset.pattern.permute.xlu0 0
      %1891 = vperm.xlu0 %1890, %v1869
      %v1892 = vpop.permute.xlu0 %1891
      %1895 = vset.pattern.permute.xlu0 0
      %1896 = vperm.xlu0 %1895, %v1870
      %v1897 = vpop.permute.xlu0 %1896
      %1900 = vset.pattern.permute.xlu0 0
      %1901 = vperm.xlu0 %1900, %v1871
      %v1902 = vpop.permute.xlu0 %1901
      %1905 = vset.pattern.permute.xlu0 0
      %1906 = vperm.xlu0 %1905, %v1872
      %v1907 = vpop.permute.xlu0 %1906
      %1910 = vset.pattern.permute.xlu0 0
      %1911 = vperm.xlu0 %1910, %v1873
      %v1912 = vpop.permute.xlu0 %1911
      %v1922 = vunpack.c.l.b16 %v1858
      %v1923 = vunpack.c.h.b16 %v1858
      %v1924 = vunpack.c.l.b16 %v1859
      %v1925 = vunpack.c.h.b16 %v1859
      %v1926 = vunpack.c.l.b16 %v1860
      %v1927 = vunpack.c.h.b16 %v1860
      %v1928 = vunpack.c.l.b16 %v1861
      %v1929 = vunpack.c.h.b16 %v1861
      %v1930 = vunpack.c.l.b16 %v1862
      %v1931 = vunpack.c.h.b16 %v1862
      %v1932 = vunpack.c.l.b16 %v1863
      %v1933 = vunpack.c.h.b16 %v1863
      %v1934 = vunpack.c.l.b16 %v1864
      %v1935 = vunpack.c.h.b16 %v1864
      %v1936 = vunpack.c.l.b16 %v1865
      %v1937 = vunpack.c.h.b16 %v1865
      %v1938 = vpack.c.b16 %v1924, %v1922
      %v1939 = vpack.c.b16 %v1925, %v1923
      %v1940 = vpack.c.b16 %v1928, %v1926
      %v1941 = vpack.c.b16 %v1929, %v1927
      %v1942 = vpack.c.b16 %v1932, %v1930
      %v1943 = vpack.c.b16 %v1933, %v1931
      %v1944 = vpack.c.b16 %v1936, %v1934
      %v1945 = vpack.c.b16 %v1937, %v1935
      %1954 = vmatprep.subr.bf16.mxu0 %v1827
      %1955 = vmatpush1.bf16.msra.mxu0 %v1826
      %1956 = vmatprep.subr.bf16.mxu0 %v1829
      %1957 = vmatpush1.bf16.msra.mxu0 %v1828
      %1958 = vmatprep.subr.bf16.mxu0 %v1831
      %1959 = vmatpush1.bf16.msra.mxu0 %v1830
      %1960 = vmatprep.subr.bf16.mxu0 %v1833
      %1961 = vmatpush1.bf16.msra.mxu0 %v1832
      %1962 = vmatprep.subr.bf16.mxu0 %v1835
      %1963 = vmatpush1.bf16.msra.mxu0 %v1834
      %1964 = vmatprep.subr.bf16.mxu0 %v1837
      %1965 = vmatpush1.bf16.msra.mxu0 %v1836
      %1966 = vmatprep.subr.bf16.mxu0 %v1839
      %1967 = vmatpush1.bf16.msra.mxu0 %v1838
      %1968 = vmatprep.subr.bf16.mxu0 %v1841
      %1969 = vmatpush1.bf16.msra.mxu0 %v1840
      %1970 = vmatprep.subr.bf16.mxu0 %v1843
      %1971 = vmatpush1.bf16.msra.mxu0 %v1842
      %1972 = vmatprep.subr.bf16.mxu0 %v1845
      %1973 = vmatpush1.bf16.msra.mxu0 %v1844
      %1974 = vmatprep.subr.bf16.mxu0 %v1847
      %1975 = vmatpush1.bf16.msra.mxu0 %v1846
      %1976 = vmatprep.subr.bf16.mxu0 %v1849
      %1977 = vmatpush1.bf16.msra.mxu0 %v1848
      %1978 = vmatprep.subr.bf16.mxu0 %v1851
      %1979 = vmatpush1.bf16.msra.mxu0 %v1850
      %1980 = vmatprep.subr.bf16.mxu0 %v1853
      %1981 = vmatpush1.bf16.msra.mxu0 %v1852
      %1982 = vmatprep.subr.bf16.mxu0 %v1855
      %1983 = vmatpush1.bf16.msra.mxu0 %v1854
      %1984 = vmatprep.subr.bf16.mxu0 %v1857
      %1985 = vmatpush1.bf16.msra.mxu0 %v1856
      %1986 = vmatprep.mubr.bf16.mxu0 %v1939
      %1987 = vmatmul.mubr.bf16.gmra.mrb[0].mxu0 %v1938
      %v1988 = vpop.f32.mrb[0].mxu0
      %v1989 = vadd.f32 %v1877, %v1988
      %v1990 = vpop.f32.mrb[0].mxu0
      %v1991 = vadd.f32 %v1877, %v1990
      %v1992 = vpop.f32.mrb[0].mxu0
      %v1993 = vadd.f32 %v1882, %v1992
      %v1994 = vpop.f32.mrb[0].mxu0
      %v1995 = vadd.f32 %v1882, %v1994
      %1996 = vmatprep.mubr.bf16.mxu0 %v1941
      %1997 = vmatmul.mubr.bf16.gmra.mrb[0].mxu0 %v1940
      %v1998 = vpop.f32.mrb[0].mxu0
      %v1999 = vadd.f32 %v1887, %v1998
      %v2000 = vpop.f32.mrb[0].mxu0
      %v2001 = vadd.f32 %v1887, %v2000
      %v2002 = vpop.f32.mrb[0].mxu0
      %v2003 = vadd.f32 %v1892, %v2002
      %v2004 = vpop.f32.mrb[0].mxu0
      %v2005 = vadd.f32 %v1892, %v2004
      %2006 = vmatprep.mubr.bf16.mxu0 %v1943
      %2007 = vmatmul.mubr.bf16.gmra.mrb[0].mxu0 %v1942
      %v2008 = vpop.f32.mrb[0].mxu0
      %v2009 = vadd.f32 %v1897, %v2008
      %v2010 = vpop.f32.mrb[0].mxu0
      %v2011 = vadd.f32 %v1897, %v2010
      %v2012 = vpop.f32.mrb[0].mxu0
      %v2013 = vadd.f32 %v1902, %v2012
      %v2014 = vpop.f32.mrb[0].mxu0
      %v2015 = vadd.f32 %v1902, %v2014
      %2016 = vmatprep.mubr.bf16.mxu0 %v1945
      %2017 = vmatmul.mubr.bf16.gmra.mrb[0].mxu0 %v1944
      %v2018 = vpop.f32.mrb[0].mxu0
      %v2019 = vadd.f32 %v1907, %v2018
      %v2020 = vpop.f32.mrb[0].mxu0
      %v2021 = vadd.f32 %v1907, %v2020
      %v2022 = vpop.f32.mrb[0].mxu0
      %v2023 = vadd.f32 %v1912, %v2022
      %v2024 = vpop.f32.mrb[0].mxu0
      %v2025 = vadd.f32 %v1912, %v2024
      %2026 = vdwg.mxu0
      %v2027 = vmul.f32 %v1989, %v1989
      %v2028 = vmul.f32 %v1991, %v1991
      %v2029 = vmul.f32 %v1993, %v1993
      %v2030 = vmul.f32 %v1995, %v1995
      %v2031 = vmul.f32 %v1999, %v1999
      %v2032 = vmul.f32 %v2001, %v2001
      %v2033 = vmul.f32 %v2003, %v2003
      %v2034 = vmul.f32 %v2005, %v2005
      %v2035 = vmul.f32 %v2009, %v2009
      %v2036 = vmul.f32 %v2011, %v2011
      %v2037 = vmul.f32 %v2013, %v2013
      %v2038 = vmul.f32 %v2015, %v2015
      %v2039 = vmul.f32 %v2019, %v2019
      %v2040 = vmul.f32 %v2021, %v2021
      %v2041 = vmul.f32 %v2023, %v2023
      %v2042 = vmul.f32 %v2025, %v2025
      %v2043 = vmul.f32 %v1989, %v2027
      %v2044 = vmul.f32 %v1991, %v2028
      %v2045 = vmul.f32 %v1993, %v2029
      %v2046 = vmul.f32 %v1995, %v2030
      %v2047 = vmul.f32 %v1999, %v2031
      %v2048 = vmul.f32 %v2001, %v2032
      %v2049 = vmul.f32 %v2003, %v2033
      %v2050 = vmul.f32 %v2005, %v2034
      %v2051 = vmul.f32 %v2009, %v2035
      %v2052 = vmul.f32 %v2011, %v2036
      %v2053 = vmul.f32 %v2013, %v2037
      %v2054 = vmul.f32 %v2015, %v2038
      %v2055 = vmul.f32 %v2019, %v2039
      %v2056 = vmul.f32 %v2021, %v2040
      %v2057 = vmul.f32 %v2023, %v2041
      %v2058 = vmul.f32 %v2025, %v2042
      %v2059 = vmul.f32 %v2043, 0.044715
      %v2060 = vmul.f32 %v2044, 0.044715
      %v2061 = vmul.f32 %v2045, 0.044715
      %v2062 = vmul.f32 %v2046, 0.044715
      %v2063 = vmul.f32 %v2047, 0.044715
      %v2064 = vmul.f32 %v2048, 0.044715
      %v2065 = vmul.f32 %v2049, 0.044715
      %v2066 = vmul.f32 %v2050, 0.044715
      %v2067 = vmul.f32 %v2051, 0.044715
      %v2068 = vmul.f32 %v2052, 0.044715
      %v2069 = vmul.f32 %v2053, 0.044715
      %v2070 = vmul.f32 %v2054, 0.044715
      %v2071 = vmul.f32 %v2055, 0.044715
      %v2072 = vmul.f32 %v2056, 0.044715
      %v2073 = vmul.f32 %v2057, 0.044715
      %v2074 = vmul.f32 %v2058, 0.044715
      %v2075 = vadd.f32 %v1989, %v2059
      %v2076 = vadd.f32 %v1991, %v2060
      %v2077 = vadd.f32 %v1993, %v2061
      %v2078 = vadd.f32 %v1995, %v2062
      %v2079 = vadd.f32 %v1999, %v2063
      %v2080 = vadd.f32 %v2001, %v2064
      %v2081 = vadd.f32 %v2003, %v2065
      %v2082 = vadd.f32 %v2005, %v2066
      %v2083 = vadd.f32 %v2009, %v2067
      %v2084 = vadd.f32 %v2011, %v2068
      %v2085 = vadd.f32 %v2013, %v2069
      %v2086 = vadd.f32 %v2015, %v2070
      %v2087 = vadd.f32 %v2019, %v2071
      %v2088 = vadd.f32 %v2021, %v2072
      %v2089 = vadd.f32 %v2023, %v2073
      %v2090 = vadd.f32 %v2025, %v2074
      %v2091 = vmul.f32 %v2075, 0.7978846
      %v2092 = vmul.f32 %v2076, 0.7978846
      %v2093 = vmul.f32 %v2077, 0.7978846
      %v2094 = vmul.f32 %v2078, 0.7978846
      %v2095 = vmul.f32 %v2079, 0.7978846
      %v2096 = vmul.f32 %v2080, 0.7978846
      %v2097 = vmul.f32 %v2081, 0.7978846
      %v2098 = vmul.f32 %v2082, 0.7978846
      %v2099 = vmul.f32 %v2083, 0.7978846
      %v2100 = vmul.f32 %v2084, 0.7978846
      %v2101 = vmul.f32 %v2085, 0.7978846
      %v2102 = vmul.f32 %v2086, 0.7978846
      %v2103 = vmul.f32 %v2087, 0.7978846
      %v2104 = vmul.f32 %v2088, 0.7978846
      %v2105 = vmul.f32 %v2089, 0.7978846
      %v2106 = vmul.f32 %v2090, 0.7978846
      %v2107 = vtanh.pop %v2091
      %v2108 = vtanh.pop %v2092
      %v2109 = vtanh.pop %v2093
      %v2110 = vtanh.pop %v2094
      %v2111 = vtanh.pop %v2095
      %v2112 = vtanh.pop %v2096
      %v2113 = vtanh.pop %v2097
      %v2114 = vtanh.pop %v2098
      %v2115 = vtanh.pop %v2099
      %v2116 = vtanh.pop %v2100
      %v2117 = vtanh.pop %v2101
      %v2118 = vtanh.pop %v2102
      %v2119 = vtanh.pop %v2103
      %v2120 = vtanh.pop %v2104
      %v2121 = vtanh.pop %v2105
      %v2122 = vtanh.pop %v2106
      %v2123 = vadd.f32 %v2107, 1.0
      %v2124 = vadd.f32 %v2108, 1.0
      %v2125 = vadd.f32 %v2109, 1.0
      %v2126 = vadd.f32 %v2110, 1.0
      %v2127 = vadd.f32 %v2111, 1.0
      %v2128 = vadd.f32 %v2112, 1.0
      %v2129 = vadd.f32 %v2113, 1.0
      %v2130 = vadd.f32 %v2114, 1.0
      %v2131 = vadd.f32 %v2115, 1.0
      %v2132 = vadd.f32 %v2116, 1.0
      %v2133 = vadd.f32 %v2117, 1.0
      %v2134 = vadd.f32 %v2118, 1.0
      %v2135 = vadd.f32 %v2119, 1.0
      %v2136 = vadd.f32 %v2120, 1.0
      %v2137 = vadd.f32 %v2121, 1.0
      %v2138 = vadd.f32 %v2122, 1.0
      %v2139 = vmul.f32 %v2123, 0.5
      %v2140 = vmul.f32 %v2124, 0.5
      %v2141 = vmul.f32 %v2125, 0.5
      %v2142 = vmul.f32 %v2126, 0.5
      %v2143 = vmul.f32 %v2127, 0.5
      %v2144 = vmul.f32 %v2128, 0.5
      %v2145 = vmul.f32 %v2129, 0.5
      %v2146 = vmul.f32 %v2130, 0.5
      %v2147 = vmul.f32 %v2131, 0.5
      %v2148 = vmul.f32 %v2132, 0.5
      %v2149 = vmul.f32 %v2133, 0.5
      %v2150 = vmul.f32 %v2134, 0.5
      %v2151 = vmul.f32 %v2135, 0.5
      %v2152 = vmul.f32 %v2136, 0.5
      %v2153 = vmul.f32 %v2137, 0.5
      %v2154 = vmul.f32 %v2138, 0.5
      %v2155 = vmul.f32 %v1989, %v2139
      %v2156 = vmul.f32 %v1991, %v2140
      %v2157 = vmul.f32 %v1993, %v2141
      %v2158 = vmul.f32 %v1995, %v2142
      %v2159 = vmul.f32 %v1999, %v2143
      %v2160 = vmul.f32 %v2001, %v2144
      %v2161 = vmul.f32 %v2003, %v2145
      %v2162 = vmul.f32 %v2005, %v2146
      %v2163 = vmul.f32 %v2009, %v2147
      %v2164 = vmul.f32 %v2011, %v2148
      %v2165 = vmul.f32 %v2013, %v2149
      %v2166 = vmul.f32 %v2015, %v2150
      %v2167 = vmul.f32 %v2019, %v2151
      %v2168 = vmul.f32 %v2021, %v2152
      %v2169 = vmul.f32 %v2023, %v2153
      %v2170 = vmul.f32 %v2025, %v2154
      %v2171 = vld [vmem:[%s7] sm:$0xf]
      %v2172 = vpack.c.bf16 %v2157, %v2155
      %v2173 = vpack.c.bf16 %v2158, %v2156
      %v2174 = vpack.c.bf16 %v2161, %v2159
      %v2175 = vpack.c.bf16 %v2162, %v2160
      %v2176 = vpack.c.bf16 %v2165, %v2163
      %v2177 = vpack.c.bf16 %v2166, %v2164
      %v2178 = vpack.c.bf16 %v2169, %v2167
      %v2179 = vpack.c.bf16 %v2170, %v2168
      %vm2180 = vcmask 523264
      %v2182 = vsel %vm2180, %v2171, 0
      %2184 = vmatprep.subr.bf16.mxu0 %v2173
      %2185 = vmatpush1.bf16.msra.mxu0 %v2172
      %2186 = vmatprep.subr.bf16.mxu0 %v2175
      %2187 = vmatpush1.bf16.msra.mxu0 %v2174
      %2188 = vmatprep.subr.bf16.mxu0 %v2177
      %2189 = vmatpush1.bf16.msra.mxu0 %v2176
      %2190 = vmatprep.subr.bf16.mxu0 %v2179
      %2191 = vmatpush1.bf16.msra.mxu0 %v2178
      %2192 = vmatprep.subr.bf16.mxu0 0
      %2193 = vmatpush1.bf16.msra.mxu0 0
      %2194 = vmatprep.subr.bf16.mxu0 0
      %2195 = vmatpush1.bf16.msra.mxu0 0
      %2196 = vmatprep.subr.bf16.mxu0 0
      %2197 = vmatpush1.bf16.msra.mxu0 0
      %2198 = vmatprep.subr.bf16.mxu0 0
      %2199 = vmatpush1.bf16.msra.mxu0 0
      %2200 = vmatprep.subr.bf16.mxu0 0
      %2201 = vmatpush1.bf16.msra.mxu0 0
      %2202 = vmatprep.subr.bf16.mxu0 0
      %2203 = vmatpush1.bf16.msra.mxu0 0
      %2204 = vmatprep.subr.bf16.mxu0 0
      %2205 = vmatpush1.bf16.msra.mxu0 0
      %2206 = vmatprep.subr.bf16.mxu0 0
      %2207 = vmatpush1.bf16.msra.mxu0 0
      %2208 = vmatprep.subr.bf16.mxu0 0
      %2209 = vmatpush1.bf16.msra.mxu0 0
      %2210 = vmatprep.subr.bf16.mxu0 0
      %2211 = vmatpush1.bf16.msra.mxu0 0
      %2212 = vmatprep.subr.bf16.mxu0 0
      %2213 = vmatpush1.bf16.msra.mxu0 0
      %2214 = vmatprep.subr.bf16.mxu0 0
      %2215 = vmatpush1.bf16.msra.mxu0 0
      %2216 = vmatprep.mubr.bf16.mxu0 0
      %2217 = vmatmul.mubr.bf16.gmra.mrb[0].mxu0 %v2182
      %v2218 = vpop.f32.mrb[0].mxu0
      %v2219 = vadd.f32 0.0, %v2218
      %v2220 = vpop.f32.mrb[0].mxu0
      %v2221 = vadd.f32 0.0, %v2220
      %v2222 = vpop.f32.mrb[0].mxu0
      %v2223 = vpop.f32.mrb[0].mxu0
      %2224 = vdwg.mxu0
      %v2225 = vadd.f32 %v2219, %v2221
      %2226 = vadd.xlane.f32.xlu0 %v2225
      %v2227 = vpop.xlane.xlu0 %2226
      %v2228 = vmul.f32 %v2155, %v2155
      %v2229 = vmul.f32 %v2156, %v2156
      %v2230 = vmul.f32 %v2157, %v2157
      %v2231 = vmul.f32 %v2158, %v2158
      %v2232 = vmul.f32 %v2159, %v2159
      %v2233 = vmul.f32 %v2160, %v2160
      %v2234 = vmul.f32 %v2161, %v2161
      %v2235 = vmul.f32 %v2162, %v2162
      %v2236 = vmul.f32 %v2163, %v2163
      %v2237 = vmul.f32 %v2164, %v2164
      %v2238 = vmul.f32 %v2165, %v2165
      %v2239 = vmul.f32 %v2166, %v2166
      %v2240 = vmul.f32 %v2167, %v2167
      %v2241 = vmul.f32 %v2168, %v2168
      %v2242 = vmul.f32 %v2169, %v2169
      %v2243 = vmul.f32 %v2170, %v2170
      %v2244 = vpack.c.bf16 %v2230, %v2228
      %v2245 = vpack.c.bf16 %v2231, %v2229
      %v2246 = vpack.c.bf16 %v2234, %v2232
      %v2247 = vpack.c.bf16 %v2235, %v2233
      %v2248 = vpack.c.bf16 %v2238, %v2236
      %v2249 = vpack.c.bf16 %v2239, %v2237
      %v2250 = vpack.c.bf16 %v2242, %v2240
      %v2251 = vpack.c.bf16 %v2243, %v2241
      %2252 = vmatprep.subr.bf16.mxu0 %v2245
      %2253 = vmatpush1.bf16.msra.mxu0 %v2244
      %2254 = vmatprep.subr.bf16.mxu0 %v2247
      %2255 = vmatpush1.bf16.msra.mxu0 %v2246
      %2256 = vmatprep.subr.bf16.mxu0 %v2249
      %2257 = vmatpush1.bf16.msra.mxu0 %v2248
      %2258 = vmatprep.subr.bf16.mxu0 %v2251
      %2259 = vmatpush1.bf16.msra.mxu0 %v2250
      %2260 = vmatprep.subr.bf16.mxu0 0
      %2261 = vmatpush1.bf16.msra.mxu0 0
      %2262 = vmatprep.subr.bf16.mxu0 0
      %2263 = vmatpush1.bf16.msra.mxu0 0
      %2264 = vmatprep.subr.bf16.mxu0 0
      %2265 = vmatpush1.bf16.msra.mxu0 0
      %2266 = vmatprep.subr.bf16.mxu0 0
      %2267 = vmatpush1.bf16.msra.mxu0 0
      %2268 = vmatprep.subr.bf16.mxu0 0
      %2269 = vmatpush1.bf16.msra.mxu0 0
      %2270 = vmatprep.subr.bf16.mxu0 0
      %2271 = vmatpush1.bf16.msra.mxu0 0
      %2272 = vmatprep.subr.bf16.mxu0 0
      %2273 = vmatpush1.bf16.msra.mxu0 0
      %2274 = vmatprep.subr.bf16.mxu0 0
      %2275 = vmatpush1.bf16.msra.mxu0 0
      %2276 = vmatprep.subr.bf16.mxu0 0
      %2277 = vmatpush1.bf16.msra.mxu0 0
      %2278 = vmatprep.subr.bf16.mxu0 0
      %2279 = vmatpush1.bf16.msra.mxu0 0
      %2280 = vmatprep.subr.bf16.mxu0 0
      %2281 = vmatpush1.bf16.msra.mxu0 0
      %2282 = vmatprep.subr.bf16.mxu0 0
      %2283 = vmatpush1.bf16.msra.mxu0 0
      %2284 = vmatprep.mubr.bf16.mxu0 0
      %2285 = vmatmul.mubr.bf16.gmra.mrb[0].mxu0 %v2182
      %v2286 = vpop.f32.mrb[0].mxu0
      %v2287 = vadd.f32 0.0, %v2286
      %v2288 = vpop.f32.mrb[0].mxu0
      %v2289 = vadd.f32 0.0, %v2288
      %v2290 = vpop.f32.mrb[0].mxu0
      %v2291 = vpop.f32.mrb[0].mxu0
      %2292 = vdwg.mxu0
      %v2293 = vadd.f32 %v2287, %v2289
      %2294 = vadd.xlane.f32.xlu0 %v2293
      %v2295 = vpop.xlane.xlu0 %2294
      %v2296 = vmul.f32 %v2227, %v2227
      %v2297 = vsub.f32 %v2295, %v2296
      %v2298 = vadd.f32 %v2297, 1e-05
      %v2299 = vrsqrt.pop %v2298
      %v2300 = vld [vmem:[%s8] sm:$0xf]
      %v2301 = vld [vmem:[%s8 + $0x4] sm:$0xf]
      %v2302 = vld [vmem:[%s8 + $0x8] sm:$0xf]
      %v2303 = vld [vmem:[%s8 + $0xc] sm:$0xf]
      %v2304 = vld [vmem:[%s8 + $0x10] sm:$0xf]
      %v2305 = vld [vmem:[%s8 + $0x14] sm:$0xf]
      %v2306 = vld [vmem:[%s8 + $0x18] sm:$0xf]
      %v2307 = vld [vmem:[%s8 + $0x1c] sm:$0xf]
      %v2308 = vpack.c.bf16 %v2299, %v2299
      %v2317 = vunpack.c.l.b16 %v2300
      %v2318 = vunpack.c.l.b16 %v2301
      %v2319 = vunpack.c.l.b16 %v2302
      %v2320 = vunpack.c.l.b16 %v2303
      %v2321 = vunpack.c.l.b16 %v2304
      %v2322 = vunpack.c.l.b16 %v2305
      %v2323 = vunpack.c.l.b16 %v2306
      %v2324 = vunpack.c.l.b16 %v2307
      %v2325 = vpack.c.b16 %v2318, %v2317
      %v2326 = vpack.c.b16 %v2320, %v2319
      %v2327 = vpack.c.b16 %v2322, %v2321
      %v2328 = vpack.c.b16 %v2324, %v2323
      %vm2329 = vcmask 64512
      %v2331 = vsel %vm2329, %v2325, 0
      %v2334 = vsel %vm2329, %v2326, 0
      %v2337 = vsel %vm2329, %v2327, 0
      %v2340 = vsel %vm2329, %v2328, 0
      %vm2342 = vcmask 1043456
      %v2344 = vsel %vm2342, %v2308, 0
      %2346 = vmatprep.subr.bf16.mxu0 %v2344
      %2347 = vmatpush1.bf16.msra.mxu0 %v2344
      %2348 = vmatprep.subr.bf16.mxu0 0
      %2349 = vmatpush1.bf16.msra.mxu0 0
      %2350 = vmatprep.subr.bf16.mxu0 0
      %2351 = vmatpush1.bf16.msra.mxu0 0
      %2352 = vmatprep.subr.bf16.mxu0 0
      %2353 = vmatpush1.bf16.msra.mxu0 0
      %2354 = vmatprep.subr.bf16.mxu0 0
      %2355 = vmatpush1.bf16.msra.mxu0 0
      %2356 = vmatprep.subr.bf16.mxu0 0
      %2357 = vmatpush1.bf16.msra.mxu0 0
      %2358 = vmatprep.subr.bf16.mxu0 0
      %2359 = vmatpush1.bf16.msra.mxu0 0
      %2360 = vmatprep.subr.bf16.mxu0 0
      %2361 = vmatpush1.bf16.msra.mxu0 0
      %2362 = vmatprep.subr.bf16.mxu0 0
      %2363 = vmatpush1.bf16.msra.mxu0 0
      %2364 = vmatprep.subr.bf16.mxu0 0
      %2365 = vmatpush1.bf16.msra.mxu0 0
      %2366 = vmatprep.subr.bf16.mxu0 0
      %2367 = vmatpush1.bf16.msra.mxu0 0
      %2368 = vmatprep.subr.bf16.mxu0 0
      %2369 = vmatpush1.bf16.msra.mxu0 0
      %2370 = vmatprep.subr.bf16.mxu0 0
      %2371 = vmatpush1.bf16.msra.mxu0 0
      %2372 = vmatprep.subr.bf16.mxu0 0
      %2373 = vmatpush1.bf16.msra.mxu0 0
      %2374 = vmatprep.subr.bf16.mxu0 0
      %2375 = vmatpush1.bf16.msra.mxu0 0
      %2376 = vmatprep.subr.bf16.mxu0 0
      %2377 = vmatpush1.bf16.msra.mxu0 0
      %2378 = vmatprep.mubr.bf16.mxu0 0
      %2379 = vmatmul.mubr.bf16.gmra.mrb[0].mxu0 %v2331
      %v2380 = vpop.f32.mrb[0].mxu0
      %v2381 = vadd.f32 0.0, %v2380
      %v2382 = vpop.f32.mrb[0].mxu0
      %v2383 = vadd.f32 0.0, %v2382
      %v2384 = vpop.f32.mrb[0].mxu0
      %v2385 = vadd.f32 0.0, %v2384
      %v2386 = vpop.f32.mrb[0].mxu0
      %v2387 = vadd.f32 0.0, %v2386
      %2388 = vmatprep.mubr.bf16.mxu0 0
      %2389 = vmatmul.mubr.bf16.gmra.mrb[0].mxu0 %v2334
      %v2390 = vpop.f32.mrb[0].mxu0
      %v2391 = vadd.f32 0.0, %v2390
      %v2392 = vpop.f32.mrb[0].mxu0
      %v2393 = vadd.f32 0.0, %v2392
      %v2394 = vpop.f32.mrb[0].mxu0
      %v2395 = vadd.f32 0.0, %v2394
      %v2396 = vpop.f32.mrb[0].mxu0
      %v2397 = vadd.f32 0.0, %v2396
      %2398 = vmatprep.mubr.bf16.mxu0 0
      %2399 = vmatmul.mubr.bf16.gmra.mrb[0].mxu0 %v2337
      %v2400 = vpop.f32.mrb[0].mxu0
      %v2401 = vadd.f32 0.0, %v2400
      %v2402 = vpop.f32.mrb[0].mxu0
      %v2403 = vadd.f32 0.0, %v2402
      %v2404 = vpop.f32.mrb[0].mxu0
      %v2405 = vadd.f32 0.0, %v2404
      %v2406 = vpop.f32.mrb[0].mxu0
      %v2407 = vadd.f32 0.0, %v2406
      %2408 = vmatprep.mubr.bf16.mxu0 0
      %2409 = vmatmul.mubr.bf16.gmra.mrb[0].mxu0 %v2340
      %v2410 = vpop.f32.mrb[0].mxu0
      %v2411 = vadd.f32 0.0, %v2410
      %v2412 = vpop.f32.mrb[0].mxu0
      %v2413 = vadd.f32 0.0, %v2412
      %v2414 = vpop.f32.mrb[0].mxu0
      %v2415 = vadd.f32 0.0, %v2414
      %v2416 = vpop.f32.mrb[0].mxu0
      %v2417 = vadd.f32 0.0, %v2416
      %2418 = vdwg.mxu0
      %v2419 = vsub.f32 0.0, %v2227
      %v2420 = vmul.f32 %v2419, %v2299
      %v2421 = vpack.c.bf16 %v2420, %v2420
      %v2423 = vsel %vm2342, %v2421, 0
      %2425 = vmatprep.subr.bf16.mxu0 %v2423
      %2426 = vmatpush1.bf16.msra.mxu0 %v2423
      %2427 = vmatprep.subr.bf16.mxu0 0
      %2428 = vmatpush1.bf16.msra.mxu0 0
      %2429 = vmatprep.subr.bf16.mxu0 0
      %2430 = vmatpush1.bf16.msra.mxu0 0
      %2431 = vmatprep.subr.bf16.mxu0 0
      %2432 = vmatpush1.bf16.msra.mxu0 0
      %2433 = vmatprep.subr.bf16.mxu0 0
      %2434 = vmatpush1.bf16.msra.mxu0 0
      %2435 = vmatprep.subr.bf16.mxu0 0
      %2436 = vmatpush1.bf16.msra.mxu0 0
      %2437 = vmatprep.subr.bf16.mxu0 0
      %2438 = vmatpush1.bf16.msra.mxu0 0
      %2439 = vmatprep.subr.bf16.mxu0 0
      %2440 = vmatpush1.bf16.msra.mxu0 0
      %2441 = vmatprep.subr.bf16.mxu0 0
      %2442 = vmatpush1.bf16.msra.mxu0 0
      %2443 = vmatprep.subr.bf16.mxu0 0
      %2444 = vmatpush1.bf16.msra.mxu0 0
      %2445 = vmatprep.subr.bf16.mxu0 0
      %2446 = vmatpush1.bf16.msra.mxu0 0
      %2447 = vmatprep.subr.bf16.mxu0 0
      %2448 = vmatpush1.bf16.msra.mxu0 0
      %2449 = vmatprep.subr.bf16.mxu0 0
      %2450 = vmatpush1.bf16.msra.mxu0 0
      %2451 = vmatprep.subr.bf16.mxu0 0
      %2452 = vmatpush1.bf16.msra.mxu0 0
      %2453 = vmatprep.subr.bf16.mxu0 0
      %2454 = vmatpush1.bf16.msra.mxu0 0
      %2455 = vmatprep.subr.bf16.mxu0 0
      %2456 = vmatpush1.bf16.msra.mxu0 0
      %2457 = vmatprep.mubr.bf16.mxu0 0
      %2458 = vmatmul.mubr.bf16.gmra.mrb[0].mxu0 %v2331
      %v2459 = vpop.f32.mrb[0].mxu0
      %v2460 = vadd.f32 0.0, %v2459
      %v2461 = vpop.f32.mrb[0].mxu0
      %v2462 = vadd.f32 0.0, %v2461
      %v2463 = vpop.f32.mrb[0].mxu0
      %v2464 = vadd.f32 0.0, %v2463
      %v2465 = vpop.f32.mrb[0].mxu0
      %v2466 = vadd.f32 0.0, %v2465
      %2467 = vmatprep.mubr.bf16.mxu0 0
      %2468 = vmatmul.mubr.bf16.gmra.mrb[0].mxu0 %v2334
      %v2469 = vpop.f32.mrb[0].mxu0
      %v2470 = vadd.f32 0.0, %v2469
      %v2471 = vpop.f32.mrb[0].mxu0
      %v2472 = vadd.f32 0.0, %v2471
      %v2473 = vpop.f32.mrb[0].mxu0
      %v2474 = vadd.f32 0.0, %v2473
      %v2475 = vpop.f32.mrb[0].mxu0
      %v2476 = vadd.f32 0.0, %v2475
      %2477 = vmatprep.mubr.bf16.mxu0 0
      %2478 = vmatmul.mubr.bf16.gmra.mrb[0].mxu0 %v2337
      %v2479 = vpop.f32.mrb[0].mxu0
      %v2480 = vadd.f32 0.0, %v2479
      %v2481 = vpop.f32.mrb[0].mxu0
      %v2482 = vadd.f32 0.0, %v2481
      %v2483 = vpop.f32.mrb[0].mxu0
      %v2484 = vadd.f32 0.0, %v2483
      %v2485 = vpop.f32.mrb[0].mxu0
      %v2486 = vadd.f32 0.0, %v2485
      %2487 = vmatprep.mubr.bf16.mxu0 0
      %2488 = vmatmul.mubr.bf16.gmra.mrb[0].mxu0 %v2340
      %v2489 = vpop.f32.mrb[0].mxu0
      %v2490 = vadd.f32 0.0, %v2489
      %v2491 = vpop.f32.mrb[0].mxu0
      %v2492 = vadd.f32 0.0, %v2491
      %v2493 = vpop.f32.mrb[0].mxu0
      %v2494 = vadd.f32 0.0, %v2493
      %v2495 = vpop.f32.mrb[0].mxu0
      %v2496 = vadd.f32 0.0, %v2495
      %2497 = vdwg.mxu0
      %v2498 = vmul.f32 %v2155, %v2381
      %v2499 = vmul.f32 %v2156, %v2383
      %v2500 = vmul.f32 %v2157, %v2385
      %v2501 = vmul.f32 %v2158, %v2387
      %v2502 = vmul.f32 %v2159, %v2391
      %v2503 = vmul.f32 %v2160, %v2393
      %v2504 = vmul.f32 %v2161, %v2395
      %v2505 = vmul.f32 %v2162, %v2397
      %v2506 = vmul.f32 %v2163, %v2401
      %v2507 = vmul.f32 %v2164, %v2403
      %v2508 = vmul.f32 %v2165, %v2405
      %v2509 = vmul.f32 %v2166, %v2407
      %v2510 = vmul.f32 %v2167, %v2411
      %v2511 = vmul.f32 %v2168, %v2413
      %v2512 = vmul.f32 %v2169, %v2415
      %v2513 = vmul.f32 %v2170, %v2417
      %v2514 = vadd.f32 %v2498, %v2460
      %v2515 = vadd.f32 %v2499, %v2462
      %v2516 = vadd.f32 %v2500, %v2464
      %v2517 = vadd.f32 %v2501, %v2466
      %v2518 = vadd.f32 %v2502, %v2470
      %v2519 = vadd.f32 %v2503, %v2472
      %v2520 = vadd.f32 %v2504, %v2474
      %v2521 = vadd.f32 %v2505, %v2476
      %v2522 = vadd.f32 %v2506, %v2480
      %v2523 = vadd.f32 %v2507, %v2482
      %v2524 = vadd.f32 %v2508, %v2484
      %v2525 = vadd.f32 %v2509, %v2486
      %v2526 = vadd.f32 %v2510, %v2490
      %v2527 = vadd.f32 %v2511, %v2492
      %v2528 = vadd.f32 %v2512, %v2494
      %v2529 = vadd.f32 %v2513, %v2496
      %v2530 = vpack.c.bf16 %v2516, %v2514
      %v2531 = vpack.c.bf16 %v2517, %v2515
      %v2532 = vpack.c.bf16 %v2520, %v2518
      %v2533 = vpack.c.bf16 %v2521, %v2519
      %v2534 = vpack.c.bf16 %v2524, %v2522
      %v2535 = vpack.c.bf16 %v2525, %v2523
      %v2536 = vpack.c.bf16 %v2528, %v2526
      %v2537 = vpack.c.bf16 %v2529, %v2527
      %v2538 = vld [vmem:[%s5] sm:$0xf]
      %v2539 = vld [vmem:[%s6] sm:$0xff]
      %2541 = vset.pattern.permute.xlu0 0
      %2542 = vperm.xlu0 %2541, %v2539
      %v2543 = vpop.permute.xlu0 %2542
      %v2546 = vsel %vm2180, %v2538, 0
      %2548 = vmatprep.subr.bf16.mxu0 %v2531
      %2549 = vmatpush1.bf16.msra.mxu0 %v2530
      %2550 = vmatprep.subr.bf16.mxu0 %v2533
      %2551 = vmatpush1.bf16.msra.mxu0 %v2532
      %2552 = vmatprep.subr.bf16.mxu0 %v2535
      %2553 = vmatpush1.bf16.msra.mxu0 %v2534
      %2554 = vmatprep.subr.bf16.mxu0 %v2537
      %2555 = vmatpush1.bf16.msra.mxu0 %v2536
      %2556 = vmatprep.subr.bf16.mxu0 0
      %2557 = vmatpush1.bf16.msra.mxu0 0
      %2558 = vmatprep.subr.bf16.mxu0 0
      %2559 = vmatpush1.bf16.msra.mxu0 0
      %2560 = vmatprep.subr.bf16.mxu0 0
      %2561 = vmatpush1.bf16.msra.mxu0 0
      %2562 = vmatprep.subr.bf16.mxu0 0
      %2563 = vmatpush1.bf16.msra.mxu0 0
      %2564 = vmatprep.subr.bf16.mxu0 0
      %2565 = vmatpush1.bf16.msra.mxu0 0
      %2566 = vmatprep.subr.bf16.mxu0 0
      %2567 = vmatpush1.bf16.msra.mxu0 0
      %2568 = vmatprep.subr.bf16.mxu0 0
      %2569 = vmatpush1.bf16.msra.mxu0 0
      %2570 = vmatprep.subr.bf16.mxu0 0
      %2571 = vmatpush1.bf16.msra.mxu0 0
      %2572 = vmatprep.subr.bf16.mxu0 0
      %2573 = vmatpush1.bf16.msra.mxu0 0
      %2574 = vmatprep.subr.bf16.mxu0 0
      %2575 = vmatpush1.bf16.msra.mxu0 0
      %2576 = vmatprep.subr.bf16.mxu0 0
      %2577 = vmatpush1.bf16.msra.mxu0 0
      %2578 = vmatprep.subr.bf16.mxu0 0
      %2579 = vmatpush1.bf16.msra.mxu0 0
      %2580 = vmatprep.mubr.bf16.mxu0 0
      %2581 = vmatmul.mubr.bf16.gmra.mrb[0].mxu0 %v2546
      %v2582 = vpop.f32.mrb[0].mxu0
      %v2583 = vadd.f32 %v2543, %v2582
      %v2584 = vpop.f32.mrb[0].mxu0
      %v2585 = vadd.f32 %v2543, %v2584
      %v2586 = vpop.f32.mrb[0].mxu0
      %v2587 = vpop.f32.mrb[0].mxu0
      %2588 = vdwg.mxu0
      %2589 = vst [vmem:[%s332] sm:$0xff] %v2583
      %2590 = vst [vmem:[%s332 + $0x8] sm:$0xff] %v2585
      %p2591 = scmp.lt.s32.totalorder %s20, 1
      %s2592 = scalar_select %p2591, %s20, 1
      %s2593 = smul.addr %s2592, 2
      %s2594 = smul.addr %s2593, 8
      %s2595 = scalar_lea.vmem %s9, %s2594
      // Predicated region
      $region57: #{_lambda_.1} parent=55 // pred_check
        %p2596 = pneg %p232
      $region58: #{_lambda_.1} parent=55 // pred_check_branch
        %2598 = sbr.rel (%p2596) target = $region60
      $region59: #{_lambda_.1} parent=55 // pred_region
        _
      $region60: #{_lambda_.1} parent=55 // pred_fallthru
        _
    $region56: #{_lambda_.1} parent=5 // pred_fallthru
      _
    %p2599 = scmp.le.s32.totalorder 2, %s15
    // Predicated region
    $region61: #{_lambda_.1} parent=5 // pred_check
      %p2600 = pneg %p2599
    $region62: #{_lambda_.1} parent=5 // pred_check_branch
      %2602 = sbr.rel (%p2600) target = $region64
    $region63: #{_lambda_.1} parent=5 // pred_region
      %s2603 = ssub.s32 %s15, 2
      // Predicated region
      $region65: #{_lambda_.1} parent=63 // pred_check
        %p2604 = pneg %p238
      $region66: #{_lambda_.1} parent=63 // pred_check_branch
        %2606 = sbr.rel (%p2604) target = $region68
      $region67: #{_lambda_.1} parent=63 // pred_region
        %p2607 = scmp.lt.s32.totalorder %s21, 1
        %s2608 = scalar_select %p2607, %s21, 1
        %s2609 = smul.addr %s2608, 2
        %s2610 = smul.addr %s2609, 8
        %s2611 = scalar_lea.vmem %s9, %s2610
      $region68: #{_lambda_.1} parent=63 // pred_fallthru
        _
    $region64: #{_lambda_.1} parent=5 // pred_fallthru
      _
  $region6: #{_lambda_.1} parent=0 // loop_footer
    %s19 = sadd.s32 1, %s15
  $region7: #{_lambda_.1} parent=0 // loop_footer_branch
    %14 = sbr.rel target = $region3
  $region8: #{_lambda_.1} parent=0 // loop_exit
    _

</llo_original>
